<compile_context>
chip_gen: v7x
topology: tpu7x:2x2x1
jax: 0.10.0
libtpu: 0.0.40
codegen_flags: <defaults>
</compile_context>

<pallas_src>
import numpy as np
import jax
import jax.numpy as jnp
from jax.experimental import pallas as pl
from jax.experimental.pallas import tpu as pltpu

# ----- hyper-parameters (small, consistent with CNN_MLP.forward) -----
HPS = dict(
    batch_size=2,   # batch
    conv_len=4,     # messages per conversation
    msg_len=8,      # tokens per message (Conv1d in_channels)
    emb_dim=32,     # per-token embedding dim after fc_emb (conv "width")
    hidden1=4,      # conv out_channels
    hidden2=104,    # == _features_size() (required by the .view in forward)
    hidden3=32,
    stride=2,
)
BERT_DIM = 48       # stand-in for the 768-dim BERT hidden size (emb_dim != BERT_DIM -> fc_emb applied)
KERNELS = (2, 3, 4, 5)
KMAX = max(KERNELS)  # 5 in-window offsets
BLK = 128            # one lane tile per in-window offset


def conv_out_len(e, k, s):
    return (e - k) // s + 1


def pool_out_len(t, k, s):
    return (t - k) // s + 1


_T = {k: conv_out_len(HPS["emb_dim"], k, HPS["stride"]) for k in KERNELS}   # conv positions per branch
_P = {k: pool_out_len(_T[k], k, HPS["stride"]) for k in KERNELS}            # pooled positions per branch
_P_TOTAL = sum(_P.values())                                                 # 26
assert _P_TOTAL * HPS["hidden1"] == HPS["hidden2"], (_P_TOTAL, HPS["hidden2"])
assert _P_TOTAL * HPS["hidden1"] <= BLK


# -------------------- the fused kernel --------------------
def fused_forward_kernel(x_ref, we_ref, be_ref, wc_ref, bc_ref,
                         w1_ref, b1_ref, w2_ref, b2_ref, w3_ref, b3_ref,
                         msk_ref, o_ref):
    # fc_emb + ReLU (block-diagonal form): (TM, L*BERT) @ (L*BERT, L*E) -> (TM, L*E).
    # bf16 operands, f32 accumulation (weight stored bf16 to halve HBM traffic).
    emb = jnp.dot(x_ref[...].astype(jnp.bfloat16), we_ref[...],
                  preferred_element_type=jnp.float32) + be_ref[...]
    emb = jnp.maximum(emb, 0.0)

    # All four Conv1d branches, window-duplicated: KMAX tile-aligned 128-lane
    # blocks; block j, column p_idx*H1 + h = ReLU(conv value at position s*p + j)
    # for that branch/pooled-window, or 0 where j >= kernel / pad column.
    conv = jnp.dot(emb.astype(jnp.bfloat16), wc_ref[...],
                   preferred_element_type=jnp.float32) + bc_ref[...]
    conv = jnp.maximum(conv, 0.0)

    # MaxPool1d(k, stride) + torch.cat(dim=2)+reshape == elementwise max of the
    # KMAX blocks (all slices are 128-aligned and 128-wide: no lane shuffles).
    # Correct because ReLU precedes MaxPool, so the padded zeros never win.
    pooled = conv[:, 0:BLK]
    for j in range(1, KMAX):
        pooled = jnp.maximum(pooled, conv[:, j * BLK:(j + 1) * BLK])

    # net_2 (Linear+ReLU, Linear+ReLU) + fc + LogSoftmax + conversation mask.
    # lin1's rows were permuted (and zero-padded to 128) offline to absorb the
    # pooled-column -> PyTorch flatten-order mapping.
    h = jnp.dot(pooled, w1_ref[...], preferred_element_type=jnp.float32) + b1_ref[...]
    h = jnp.maximum(h, 0.0)
    h = jnp.dot(h, w2_ref[...], preferred_element_type=jnp.float32) + b2_ref[...]
    h = jnp.maximum(h, 0.0)
    logits = jnp.dot(h, w3_ref[...], preferred_element_type=jnp.float32) + b3_ref[...]
    z = logits - jnp.max(logits, axis=-1, keepdims=True)
    logp = z - jnp.log(jnp.sum(jnp.exp(z), axis=-1, keepdims=True))
    o_ref[...] = logp * msk_ref[...]


# -------------------- parameters (PyTorch layout) --------------------
def init_params(key):
    def uniform(k, shape, fan_in):
        bound = 1.0 / jnp.sqrt(jnp.float32(fan_in))
        return jax.random.uniform(k, shape, jnp.float32, -bound, bound)

    def linear(k, fan_in, fan_out):
        kw, kb = jax.random.split(k)
        return uniform(kw, (fan_in, fan_out), fan_in), uniform(kb, (1, fan_out), fan_in)

    L, E, H1, H2, H3 = (HPS["msg_len"], HPS["emb_dim"], HPS["hidden1"],
                        HPS["hidden2"], HPS["hidden3"])
    keys = jax.random.split(key, 8)
    params = {"fc_emb": linear(keys[0], BERT_DIM, E)}
    for i, k in enumerate(KERNELS):
        kw, kb = jax.random.split(keys[1 + i])
        params[f"conv{k}"] = (uniform(kw, (H1, L, k), L * k),   # torch Conv1d weight (out, in, k)
                              uniform(kb, (1, H1), L * k))
    params["lin1"] = linear(keys[5], H2, H2)
    params["lin2"] = linear(keys[6], H2, H3)
    params["fc"] = linear(keys[7], H3, 2)
    return params


def pack_params(params):
    """One-time repack of the PyTorch-layout parameters into the fused-kernel layout."""
    L, E, H1, s = HPS["msg_len"], HPS["emb_dim"], HPS["hidden1"], HPS["stride"]
    H2 = HPS["hidden2"]

    # fc_emb as a block-diagonal GEMM (stored bf16): the kernel's emb output lands
    # directly in the (TM, L*E) row layout the conv GEMM consumes.
    we, be = params["fc_emb"]
    we_blk = jnp.kron(jnp.eye(L, dtype=jnp.float32), we).astype(jnp.bfloat16)  # (L*BERT, L*E)
    be_blk = jnp.tile(be, (1, L))                                              # (1, L*E) f32

    # Window-duplicated conv weight bank (stored bf16):
    #   wc2[c*E + (s*t + u), j*BLK + p_idx*H1 + h] = conv_k.weight[h, c, u]
    # with t = s*p + j, for j < k; zero otherwise (and zero bias), so the kernel's
    # elementwise max over the j-blocks reproduces MaxPool1d(ReLU(conv)) exactly.
    pool_cols = [(k, p) for k in KERNELS for p in range(_P[k])]   # global pooled index order
    wc2 = np.zeros((L * E, KMAX * BLK), np.float32)
    bc2 = np.zeros((1, KMAX * BLK), np.float32)
    for j in range(KMAX):
        for p_idx, (k, p) in enumerate(pool_cols):
            if j >= k:
                continue
            w, b = params[f"conv{k}"]                              # (H1, L, k), (1, H1)
            w = np.asarray(w)
            b = np.asarray(b)
            t = s * p + j                                          # conv output position
            col = j * BLK + p_idx * H1
            for c in range(L):
                wc2[c * E + s * t: c * E + s * t + k, col:col + H1] = w[:, c, :].T
            bc2[0, col:col + H1] = b[0, :]

    # lin1 rows permuted from PyTorch's union order f_pt = h*P_total + p_idx to the
    # kernel's pooled-column order f_ours = p_idx*H1 + h, zero-padded to 128 rows.
    w1, b1 = params["lin1"]
    perm = [(f % H1) * _P_TOTAL + f // H1 for f in range(H1 * _P_TOTAL)]
    w1p = np.zeros((BLK, H2), np.float32)
    w1p[:H1 * _P_TOTAL, :] = np.asarray(w1)[perm, :]

    return dict(
        fc_emb=(we_blk, be_blk),
        conv=(jnp.asarray(wc2).astype(jnp.bfloat16), jnp.asarray(bc2)),
        lin1=(jnp.asarray(w1p), b1),
        lin2=params["lin2"],
        fc=params["fc"],
    )


# -------------------- forward --------------------
def cnn_mlp_forward(bert_emb, msk_conv, packed):
    """bert_emb: (batch*conv_len, msg_len, BERT_DIM); msk_conv: (batch, conv_len).
    Returns (conv_len, batch, 2) masked log-probabilities, matching CNN_MLP.forward."""
    B, C, L, E = HPS["batch_size"], HPS["conv_len"], HPS["msg_len"], HPS["emb_dim"]
    H2, H3 = HPS["hidden2"], HPS["hidden3"]
    N = B * C
    x_wide = bert_emb.reshape(N, L * BERT_DIM)                  # row-major, free reshape
    # PyTorch masks after .view(conv_len, batch, ...) with an equally re-viewed mask,
    # i.e. a flat-order (n = b*conv_len + c) row-wise multiply — done here flat.
    msk_flat = msk_conv.reshape(N, 1).astype(jnp.float32)

    we, be = packed["fc_emb"]
    wc, bc = packed["conv"]
    w1, b1 = packed["lin1"]
    w2, b2 = packed["lin2"]
    w3, b3 = packed["fc"]

    # M-tile grid: weights get constant index_maps (VMEM-resident across steps);
    # the M axis is "parallel" (splits across both TensorCores on v7x for larger
    # batches).  TM=8 here (whole demo batch -> single grid step); bump for big N.
    TM = 8
    assert N % TM == 0
    grid = (N // TM,)
    row_map = lambda i: (i, 0)
    const_map = lambda i: (0, 0)

    flops = 2 * N * (L * BERT_DIM * L * E + L * E * KMAX * BLK + BLK * H2 + H2 * H3 + H3 * 2)
    transcendentals = 3 * N                              # 2 exp + 1 log per row
    bytes_accessed = int(
        x_wide.size * x_wide.dtype.itemsize + msk_flat.size * 4 + N * 2 * 4
        + sum(int(a.size) * a.dtype.itemsize for a in (we, be, wc, bc, w1, b1, w2, b2, w3, b3)))

    out_flat = pl.pallas_call(
        fused_forward_kernel,
        out_shape=jax.ShapeDtypeStruct((N, 2), jnp.float32),
        grid=grid,
        in_specs=[
            pl.BlockSpec((TM, L * BERT_DIM), row_map),   # activations: tiled over M
            pl.BlockSpec(we.shape, const_map),           # weights: resident across grid
            pl.BlockSpec(be.shape, const_map),
            pl.BlockSpec(wc.shape, const_map),
            pl.BlockSpec(bc.shape, const_map),
            pl.BlockSpec(w1.shape, const_map),
            pl.BlockSpec(b1.shape, const_map),
            pl.BlockSpec(w2.shape, const_map),
            pl.BlockSpec(b2.shape, const_map),
            pl.BlockSpec(w3.shape, const_map),
            pl.BlockSpec(b3.shape, const_map),
            pl.BlockSpec((TM, 1), row_map),
        ],
        out_specs=pl.BlockSpec((TM, 2), row_map),
        compiler_params=pltpu.CompilerParams(dimension_semantics=("parallel",)),
        cost_estimate=pl.CostEstimate(flops=flops, transcendentals=transcendentals,
                                      bytes_accessed=bytes_accessed),
    )(x_wide, we, be, wc, bc, w1, b1, w2, b2, w3, b3, msk_flat)
    return out_flat.reshape(C, B, 2)   # same flat-order reinterpretation as torch .view


# -------------------- pure-JAX reference (unpacked params) --------------------
def reference_forward(bert_emb, msk_conv, params):
    B, C, E = HPS["batch_size"], HPS["conv_len"], HPS["emb_dim"]
    H1, s = HPS["hidden1"], HPS["stride"]
    N = B * C
    hi = jax.lax.Precision.HIGHEST

    we, be = params["fc_emb"]
    emb = jnp.maximum(jnp.einsum("nld,de->nle", bert_emb, we, precision=hi) + be, 0.0)
    branches = []
    for k in KERNELS:
        T, P = _T[k], _P[k]
        w, b = params[f"conv{k}"]
        conv = jnp.stack(
            [jnp.einsum("ncj,hcj->nh", emb[:, :, s * t:s * t + k], w, precision=hi)
             for t in range(T)], axis=-1)                        # (N, H1, T)
        conv = jnp.maximum(conv + b.reshape(1, H1, 1), 0.0)
        pooled = jnp.stack(
            [jnp.max(conv[:, :, s * p:s * p + k], axis=-1) for p in range(P)], axis=-1)
        branches.append(pooled)                                  # (N, H1, P)
    union = jnp.concatenate(branches, axis=2).reshape(N, -1)     # (N, hidden2)

    w1, b1 = params["lin1"]
    w2, b2 = params["lin2"]
    w3, b3 = params["fc"]
    h = jnp.maximum(jnp.dot(union, w1, precision=hi) + b1, 0.0)
    h = jnp.maximum(jnp.dot(h, w2, precision=hi) + b2, 0.0)
    logits = jnp.dot(h, w3, precision=hi) + b3
    logp = jax.nn.log_softmax(logits, axis=-1)
    return (logp * msk_conv.reshape(N, 1)).reshape(C, B, 2)


if __name__ == "__main__":
    key = jax.random.PRNGKey(0)
    kp, ke = jax.random.split(key)
    params = init_params(kp)
    packed = pack_params(params)           # one-time weight repack (off the hot path)

    B, C, L = HPS["batch_size"], HPS["conv_len"], HPS["msg_len"]
    N = B * C
    # TODO(synk): the pretrained BertModel encoder has no Pallas equivalent; its
    # extracted hidden-state embedding (after the [:, 1:-1, :] slice) is taken as input.
    bert_emb = jax.random.normal(ke, (N, L, BERT_DIM), jnp.float32)
    msk_conv = jnp.array([[1.0, 1.0, 1.0, 0.0],
                          [1.0, 1.0, 0.0, 0.0]], jnp.float32)    # (batch, conv_len)

    fwd = jax.jit(cnn_mlp_forward)
    out = fwd(bert_emb, msk_conv, packed)
    jax.block_until_ready(out)
    assert out.shape == (C, B, 2), out.shape

    ref = reference_forward(bert_emb, msk_conv, params)
    err = float(jnp.max(jnp.abs(out - ref)))
    assert err < 5e-2, f"kernel/reference mismatch: max abs err = {err}"

    print("KERNEL_OK")
</pallas_src>

<mosaic_0001>
module attributes {stable_mosaic.version = 11 : i64} {
  func.func @fused_forward_kernel(%arg0: i32, %arg1: memref<8x384xf32, #tpu.memory_space<vmem>>, %arg2: memref<384x256xbf16, #tpu.memory_space<vmem>>, %arg3: memref<1x256xf32, #tpu.memory_space<vmem>>, %arg4: memref<256x640xbf16, #tpu.memory_space<vmem>>, %arg5: memref<1x640xf32, #tpu.memory_space<vmem>>, %arg6: memref<128x104xf32, #tpu.memory_space<vmem>>, %arg7: memref<1x104xf32, #tpu.memory_space<vmem>>, %arg8: memref<104x32xf32, #tpu.memory_space<vmem>>, %arg9: memref<1x32xf32, #tpu.memory_space<vmem>>, %arg10: memref<32x2xf32, #tpu.memory_space<vmem>>, %arg11: memref<1x2xf32, #tpu.memory_space<vmem>>, %arg12: memref<8x1xf32, #tpu.memory_space<vmem>>, %arg13: memref<8x2xf32, #tpu.memory_space<vmem>>) attributes {dimension_semantics = [#tpu.dimension_semantics<parallel>], iteration_bounds = array<i64: 1>, scalar_prefetch = 0 : i64, scratch_operands = 0 : i64, tpu.core_type = #tpu.core_type<tc>, window_params = [{transform_indices = @transform_0, window_bounds = array<i64: 8, 384>}, {pipeline_mode = #tpu.pipeline_mode<synchronous>, transform_indices = @transform_1, window_bounds = array<i64: 384, 256>}, {pipeline_mode = #tpu.pipeline_mode<synchronous>, transform_indices = @transform_2, window_bounds = array<i64: 1, 256>}, {pipeline_mode = #tpu.pipeline_mode<synchronous>, transform_indices = @transform_3, window_bounds = array<i64: 256, 640>}, {pipeline_mode = #tpu.pipeline_mode<synchronous>, transform_indices = @transform_4, window_bounds = array<i64: 1, 640>}, {pipeline_mode = #tpu.pipeline_mode<synchronous>, transform_indices = @transform_5, window_bounds = array<i64: 128, 104>}, {pipeline_mode = #tpu.pipeline_mode<synchronous>, transform_indices = @transform_6, window_bounds = array<i64: 1, 104>}, {pipeline_mode = #tpu.pipeline_mode<synchronous>, transform_indices = @transform_7, window_bounds = array<i64: 104, 32>}, {pipeline_mode = #tpu.pipeline_mode<synchronous>, transform_indices = @transform_8, window_bounds = array<i64: 1, 32>}, {pipeline_mode = #tpu.pipeline_mode<synchronous>, transform_indices = @transform_9, window_bounds = array<i64: 32, 2>}, {pipeline_mode = #tpu.pipeline_mode<synchronous>, transform_indices = @transform_10, window_bounds = array<i64: 1, 2>}, {transform_indices = @transform_11, window_bounds = array<i64: 8, 1>}, {transform_indices = @transform_12, window_bounds = array<i64: 8, 2>}]} {
    %c0 = arith.constant 0 : index
    %c0_0 = arith.constant 0 : index
    %0 = vector.load %arg1[%c0, %c0_0] : memref<8x384xf32, #tpu.memory_space<vmem>>, vector<8x384xf32>
    %1 = arith.truncf %0 : vector<8x384xf32> to vector<8x384xbf16>
    %c0_1 = arith.constant 0 : index
    %c0_2 = arith.constant 0 : index
    %2 = vector.load %arg2[%c0_1, %c0_2] : memref<384x256xbf16, #tpu.memory_space<vmem>>, vector<384x256xbf16>
    %cst = arith.constant dense<0.000000e+00> : vector<8x256xf32>
    %3 = tpu.matmul %1, %2, %cst {dimension_numbers = #tpu.dot_dimension_numbers<[1], [0], [0], [1], [0, 0, 1, 1], [], []>} : vector<8x384xbf16>, vector<384x256xbf16>, vector<8x256xf32> -> vector<8x256xf32>
    %c0_3 = arith.constant 0 : index
    %c0_4 = arith.constant 0 : index
    %4 = vector.load %arg3[%c0_3, %c0_4] : memref<1x256xf32, #tpu.memory_space<vmem>>, vector<1x256xf32>
    %5 = vector.broadcast %4 : vector<1x256xf32> to vector<8x256xf32>
    %6 = arith.addf %3, %5 : vector<8x256xf32>
    %cst_5 = arith.constant 0.000000e+00 : f32
    %7 = vector.broadcast %cst_5 : f32 to vector<8x256xf32>
    %8 = arith.maximumf %6, %7 : vector<8x256xf32>
    %9 = arith.truncf %8 : vector<8x256xf32> to vector<8x256xbf16>
    %c0_6 = arith.constant 0 : index
    %c0_7 = arith.constant 0 : index
    %10 = vector.load %arg4[%c0_6, %c0_7] : memref<256x640xbf16, #tpu.memory_space<vmem>>, vector<256x640xbf16>
    %cst_8 = arith.constant dense<0.000000e+00> : vector<8x640xf32>
    %11 = tpu.matmul %9, %10, %cst_8 {dimension_numbers = #tpu.dot_dimension_numbers<[1], [0], [0], [1], [0, 0, 1, 1], [], []>} : vector<8x256xbf16>, vector<256x640xbf16>, vector<8x640xf32> -> vector<8x640xf32>
    %c0_9 = arith.constant 0 : index
    %c0_10 = arith.constant 0 : index
    %12 = vector.load %arg5[%c0_9, %c0_10] : memref<1x640xf32, #tpu.memory_space<vmem>>, vector<1x640xf32>
    %13 = vector.broadcast %12 : vector<1x640xf32> to vector<8x640xf32>
    %14 = arith.addf %11, %13 : vector<8x640xf32>
    %cst_11 = arith.constant 0.000000e+00 : f32
    %15 = vector.broadcast %cst_11 : f32 to vector<8x640xf32>
    %16 = arith.maximumf %14, %15 : vector<8x640xf32>
    %17 = vector.extract_strided_slice %16 {offsets = [0, 0], sizes = [8, 128], strides = [1, 1]} : vector<8x640xf32> to vector<8x128xf32>
    %18 = vector.extract_strided_slice %16 {offsets = [0, 128], sizes = [8, 128], strides = [1, 1]} : vector<8x640xf32> to vector<8x128xf32>
    %19 = arith.maximumf %17, %18 : vector<8x128xf32>
    %20 = vector.extract_strided_slice %16 {offsets = [0, 256], sizes = [8, 128], strides = [1, 1]} : vector<8x640xf32> to vector<8x128xf32>
    %21 = arith.maximumf %19, %20 : vector<8x128xf32>
    %22 = vector.extract_strided_slice %16 {offsets = [0, 384], sizes = [8, 128], strides = [1, 1]} : vector<8x640xf32> to vector<8x128xf32>
    %23 = arith.maximumf %21, %22 : vector<8x128xf32>
    %24 = vector.extract_strided_slice %16 {offsets = [0, 512], sizes = [8, 128], strides = [1, 1]} : vector<8x640xf32> to vector<8x128xf32>
    %25 = arith.maximumf %23, %24 : vector<8x128xf32>
    %c0_12 = arith.constant 0 : index
    %c0_13 = arith.constant 0 : index
    %26 = vector.load %arg6[%c0_12, %c0_13] : memref<128x104xf32, #tpu.memory_space<vmem>>, vector<128x104xf32>
    %cst_14 = arith.constant dense<0.000000e+00> : vector<8x104xf32>
    %27 = tpu.matmul %25, %26, %cst_14 {dimension_numbers = #tpu.dot_dimension_numbers<[1], [0], [0], [1], [0, 0, 1, 1], [], []>} : vector<8x128xf32>, vector<128x104xf32>, vector<8x104xf32> -> vector<8x104xf32>
    %c0_15 = arith.constant 0 : index
    %c0_16 = arith.constant 0 : index
    %28 = vector.load %arg7[%c0_15, %c0_16] : memref<1x104xf32, #tpu.memory_space<vmem>>, vector<1x104xf32>
    %29 = vector.broadcast %28 : vector<1x104xf32> to vector<8x104xf32>
    %30 = arith.addf %27, %29 : vector<8x104xf32>
    %cst_17 = arith.constant 0.000000e+00 : f32
    %31 = vector.broadcast %cst_17 : f32 to vector<8x104xf32>
    %32 = arith.maximumf %30, %31 : vector<8x104xf32>
    %c0_18 = arith.constant 0 : index
    %c0_19 = arith.constant 0 : index
    %33 = vector.load %arg8[%c0_18, %c0_19] : memref<104x32xf32, #tpu.memory_space<vmem>>, vector<104x32xf32>
    %cst_20 = arith.constant dense<0.000000e+00> : vector<8x32xf32>
    %34 = tpu.matmul %32, %33, %cst_20 {dimension_numbers = #tpu.dot_dimension_numbers<[1], [0], [0], [1], [0, 0, 1, 1], [], []>} : vector<8x104xf32>, vector<104x32xf32>, vector<8x32xf32> -> vector<8x32xf32>
    %c0_21 = arith.constant 0 : index
    %c0_22 = arith.constant 0 : index
    %35 = vector.load %arg9[%c0_21, %c0_22] : memref<1x32xf32, #tpu.memory_space<vmem>>, vector<1x32xf32>
    %36 = vector.broadcast %35 : vector<1x32xf32> to vector<8x32xf32>
    %37 = arith.addf %34, %36 : vector<8x32xf32>
    %cst_23 = arith.constant 0.000000e+00 : f32
    %38 = vector.broadcast %cst_23 : f32 to vector<8x32xf32>
    %39 = arith.maximumf %37, %38 : vector<8x32xf32>
    %c0_24 = arith.constant 0 : index
    %c0_25 = arith.constant 0 : index
    %40 = vector.load %arg10[%c0_24, %c0_25] : memref<32x2xf32, #tpu.memory_space<vmem>>, vector<32x2xf32>
    %cst_26 = arith.constant dense<0.000000e+00> : vector<8x2xf32>
    %41 = tpu.matmul %39, %40, %cst_26 {dimension_numbers = #tpu.dot_dimension_numbers<[1], [0], [0], [1], [0, 0, 1, 1], [], []>} : vector<8x32xf32>, vector<32x2xf32>, vector<8x2xf32> -> vector<8x2xf32>
    %c0_27 = arith.constant 0 : index
    %c0_28 = arith.constant 0 : index
    %42 = vector.load %arg11[%c0_27, %c0_28] : memref<1x2xf32, #tpu.memory_space<vmem>>, vector<1x2xf32>
    %43 = vector.broadcast %42 : vector<1x2xf32> to vector<8x2xf32>
    %44 = arith.addf %41, %43 : vector<8x2xf32>
    %cst_29 = arith.constant dense<0xFF800000> : vector<8xf32>
    %45 = vector.multi_reduction <maximumf>, %44, %cst_29 [1] : vector<8x2xf32> to vector<8xf32>
    %46 = vector.shape_cast %45 : vector<8xf32> to vector<8x1xf32>
    %47 = vector.broadcast %46 : vector<8x1xf32> to vector<8x2xf32>
    %48 = arith.subf %44, %47 : vector<8x2xf32>
    %49 = math.exp %48 : vector<8x2xf32>
    %cst_30 = arith.constant dense<0.000000e+00> : vector<8xf32>
    %50 = vector.multi_reduction <add>, %49, %cst_30 [1] : vector<8x2xf32> to vector<8xf32>
    %51 = vector.shape_cast %50 : vector<8xf32> to vector<8x1xf32>
    %52 = math.log %51 : vector<8x1xf32>
    %53 = vector.broadcast %52 : vector<8x1xf32> to vector<8x2xf32>
    %54 = arith.subf %48, %53 : vector<8x2xf32>
    %c0_31 = arith.constant 0 : index
    %c0_32 = arith.constant 0 : index
    %55 = vector.load %arg12[%c0_31, %c0_32] : memref<8x1xf32, #tpu.memory_space<vmem>>, vector<8x1xf32>
    %56 = vector.broadcast %55 : vector<8x1xf32> to vector<8x2xf32>
    %57 = arith.mulf %54, %56 : vector<8x2xf32>
    %c0_33 = arith.constant 0 : index
    %c0_34 = arith.constant 0 : index
    %58 = vector.load %arg13[%c0_33, %c0_34] : memref<8x2xf32, #tpu.memory_space<vmem>>, vector<8x2xf32>
    tpu.vector_store %arg13[%c0_33, %c0_34], %57 {strides = array<i32>} : memref<8x2xf32, #tpu.memory_space<vmem>>, vector<8x2xf32>,
    return
  }
  func.func @transform_0(%arg0: i32) -> (i32, i32) {
    %c0_i32 = arith.constant 0 : i32
    %c0_i32_0 = arith.constant 0 : i32
    return %arg0, %c0_i32 : i32, i32
  }
  func.func @transform_1(%arg0: i32) -> (i32, i32) {
    %c0_i32 = arith.constant 0 : i32
    %c0_i32_0 = arith.constant 0 : i32
    %c0_i32_1 = arith.constant 0 : i32
    return %c0_i32, %c0_i32_0 : i32, i32
  }
  func.func @transform_2(%arg0: i32) -> (i32, i32) {
    %c0_i32 = arith.constant 0 : i32
    %c0_i32_0 = arith.constant 0 : i32
    %c0_i32_1 = arith.constant 0 : i32
    return %c0_i32, %c0_i32_0 : i32, i32
  }
  func.func @transform_3(%arg0: i32) -> (i32, i32) {
    %c0_i32 = arith.constant 0 : i32
    %c0_i32_0 = arith.constant 0 : i32
    %c0_i32_1 = arith.constant 0 : i32
    return %c0_i32, %c0_i32_0 : i32, i32
  }
  func.func @transform_4(%arg0: i32) -> (i32, i32) {
    %c0_i32 = arith.constant 0 : i32
    %c0_i32_0 = arith.constant 0 : i32
    %c0_i32_1 = arith.constant 0 : i32
    return %c0_i32, %c0_i32_0 : i32, i32
  }
  func.func @transform_5(%arg0: i32) -> (i32, i32) {
    %c0_i32 = arith.constant 0 : i32
    %c0_i32_0 = arith.constant 0 : i32
    %c0_i32_1 = arith.constant 0 : i32
    return %c0_i32, %c0_i32_0 : i32, i32
  }
  func.func @transform_6(%arg0: i32) -> (i32, i32) {
    %c0_i32 = arith.constant 0 : i32
    %c0_i32_0 = arith.constant 0 : i32
    %c0_i32_1 = arith.constant 0 : i32
    return %c0_i32, %c0_i32_0 : i32, i32
  }
  func.func @transform_7(%arg0: i32) -> (i32, i32) {
    %c0_i32 = arith.constant 0 : i32
    %c0_i32_0 = arith.constant 0 : i32
    %c0_i32_1 = arith.constant 0 : i32
    return %c0_i32, %c0_i32_0 : i32, i32
  }
  func.func @transform_8(%arg0: i32) -> (i32, i32) {
    %c0_i32 = arith.constant 0 : i32
    %c0_i32_0 = arith.constant 0 : i32
    %c0_i32_1 = arith.constant 0 : i32
    return %c0_i32, %c0_i32_0 : i32, i32
  }
  func.func @transform_9(%arg0: i32) -> (i32, i32) {
    %c0_i32 = arith.constant 0 : i32
    %c0_i32_0 = arith.constant 0 : i32
    %c0_i32_1 = arith.constant 0 : i32
    return %c0_i32, %c0_i32_0 : i32, i32
  }
  func.func @transform_10(%arg0: i32) -> (i32, i32) {
    %c0_i32 = arith.constant 0 : i32
    %c0_i32_0 = arith.constant 0 : i32
    %c0_i32_1 = arith.constant 0 : i32
    return %c0_i32, %c0_i32_0 : i32, i32
  }
  func.func @transform_11(%arg0: i32) -> (i32, i32) {
    %c0_i32 = arith.constant 0 : i32
    %c0_i32_0 = arith.constant 0 : i32
    return %arg0, %c0_i32 : i32, i32
  }
  func.func @transform_12(%arg0: i32) -> (i32, i32) {
    %c0_i32 = arith.constant 0 : i32
    %c0_i32_0 = arith.constant 0 : i32
    return %arg0, %c0_i32 : i32, i32
  }
}

</mosaic_0001>

<llo_original>
// kernel: cnn_mlp_forward.1
$region0: #{cnn_mlp_forward.1}
  #allocation0 [shape = 'u32[]', space=smem, size = 0x4, offset = 0x4, fixed_abs, tag = 'smem constant byte address 0x4 - core index']
  #allocation1 [shape = 'u32[144,128]{1,0:T(1,128)}', space=vmem, size = 0x12000, scoped, tag = 'internal scratch']
  %s0 = inlined_call_operand.vmem [shape: f32[8,384], index: 0, kind: input, shape index: {}]
  %s1 = inlined_call_operand.vmem [shape: bf16[384,256], index: 1, kind: input, shape index: {}]
  %s2 = inlined_call_operand.hbm [shape: f32[1,256], index: 2, kind: input, shape index: {}]
  %s3 = inlined_call_operand.hbm [shape: bf16[256,640], index: 3, kind: input, shape index: {}]
  %s4 = inlined_call_operand.vmem [shape: f32[1,640], index: 4, kind: input, shape index: {}]
  %s5 = inlined_call_operand.vmem [shape: f32[128,104], index: 5, kind: input, shape index: {}]
  %s6 = inlined_call_operand.vmem [shape: f32[1,104], index: 6, kind: input, shape index: {}]
  %s7 = inlined_call_operand.vmem [shape: f32[104,32], index: 7, kind: input, shape index: {}]
  %s8 = inlined_call_operand.vmem [shape: f32[1,32], index: 8, kind: input, shape index: {}]
  %s9 = inlined_call_operand.vmem [shape: f32[32,2], index: 9, kind: input, shape index: {}]
  %s10 = inlined_call_operand.hbm [shape: f32[1,2], index: 10, kind: input, shape index: {}]
  %s11 = inlined_call_operand.vmem [shape: f32[8,1], index: 11, kind: input, shape index: {}]
  %s12 = inlined_call_operand.vmem [shape: f32[8,2], index: 12, kind: output, shape index: {}]
  %s13 = sld [smem:[#allocation0]]
  $region70: #{cnn_mlp_forward.1} parent=0
    _
  %s15 = ssub.s32 1, %s13
  %s16 = scalar_select 0, %s15, %s13
  $region1: #{cnn_mlp_forward.1} parent=0
    #allocation2 [shape = 'u8[1024]{0}', space=vmem, size = 0x400, scoped, tag = 'input window, operand 2, single buffered']
    #allocation3 [shape = 's32[1]{0}', space=sflag, size = 0x4, scoped, tag = 'scoped memory for cnn_mlp_forward.1']
    #allocation4 [shape = 'u8[327680]{0}', space=vmem, size = 0x50000, scoped, tag = 'input window, operand 3, single buffered']
    #allocation5 [shape = 's32[1]{0}', space=sflag, size = 0x4, scoped, tag = 'scoped memory for cnn_mlp_forward.1']
    #allocation6 [shape = 'u8[512]{0}', space=vmem, size = 0x400, scoped, tag = 'input window, operand 10, single buffered']
    %17 = vsyncpa [#allocation3], 0
    %18 = vsyncpa [#allocation5], 0
    // Predicated region
    $region2: #{cnn_mlp_forward.1} parent=1 // pred_check
      _
    $region3: #{cnn_mlp_forward.1} parent=1 // pred_check_branch
      %20 = sbr.rel (0) target = $region5
    $region4: #{cnn_mlp_forward.1} parent=1 // pred_region
      _
    $region5: #{cnn_mlp_forward.1} parent=1 // pred_fallthru
      _
    // Predicated region
    $region6: #{cnn_mlp_forward.1} parent=1 // pred_check
      _
    $region7: #{cnn_mlp_forward.1} parent=1 // pred_check_branch
      %22 = sbr.rel (0) target = $region9
    $region8: #{cnn_mlp_forward.1} parent=1 // pred_region
      _
    $region9: #{cnn_mlp_forward.1} parent=1 // pred_fallthru
      _
    // Predicated region
    $region10: #{cnn_mlp_forward.1} parent=1 // pred_check
      _
    $region11: #{cnn_mlp_forward.1} parent=1 // pred_check_branch
      %24 = sbr.rel (0) target = $region13
    $region12: #{cnn_mlp_forward.1} parent=1 // pred_region
      %s26 = ssub.s32 32, 32
      %27 = vsyncadd [#allocation3], %s26
      %s29 = sshll.u32 [#allocation2], 4
      %s30 = int_to_ptr.vmem [resolvable:$true] %s29
      %32 = dma.hbm_to_vmem [thread:$0]  %s2, 32, %s30, [#allocation3]
    $region13: #{cnn_mlp_forward.1} parent=1 // pred_fallthru
      _
    // Predicated region
    $region14: #{cnn_mlp_forward.1} parent=1 // pred_check
      _
    $region15: #{cnn_mlp_forward.1} parent=1 // pred_check_branch
      %34 = sbr.rel (0) target = $region17
    $region16: #{cnn_mlp_forward.1} parent=1 // pred_region
      %s36 = ssub.s32 10240, 10240
      %37 = vsyncadd [#allocation5], %s36
      %s38 = sshll.u32 [#allocation4], 4
      %s39 = int_to_ptr.vmem [resolvable:$true] %s38
      %44 = dma.hbm_to_vmem [thread:$0]  %s3, 10240, %s39, [#allocation5], 320, 320, 20
    $region17: #{cnn_mlp_forward.1} parent=1 // pred_fallthru
      _
    // Predicated region
    $region18: #{cnn_mlp_forward.1} parent=1 // pred_check
      _
    $region19: #{cnn_mlp_forward.1} parent=1 // pred_check_branch
      %46 = sbr.rel (0) target = $region21
    $region20: #{cnn_mlp_forward.1} parent=1 // pred_region
      _
    $region21: #{cnn_mlp_forward.1} parent=1 // pred_fallthru
      _
    // Predicated region
    $region22: #{cnn_mlp_forward.1} parent=1 // pred_check
      _
    $region23: #{cnn_mlp_forward.1} parent=1 // pred_check_branch
      %48 = sbr.rel (0) target = $region25
    $region24: #{cnn_mlp_forward.1} parent=1 // pred_region
      _
    $region25: #{cnn_mlp_forward.1} parent=1 // pred_fallthru
      _
    // Predicated region
    $region26: #{cnn_mlp_forward.1} parent=1 // pred_check
      _
    $region27: #{cnn_mlp_forward.1} parent=1 // pred_check_branch
      %50 = sbr.rel (0) target = $region29
    $region28: #{cnn_mlp_forward.1} parent=1 // pred_region
      _
    $region29: #{cnn_mlp_forward.1} parent=1 // pred_fallthru
      _
    // Predicated region
    $region30: #{cnn_mlp_forward.1} parent=1 // pred_check
      _
    $region31: #{cnn_mlp_forward.1} parent=1 // pred_check_branch
      %52 = sbr.rel (0) target = $region33
    $region32: #{cnn_mlp_forward.1} parent=1 // pred_region
      _
    $region33: #{cnn_mlp_forward.1} parent=1 // pred_fallthru
      _
    // Predicated region
    $region34: #{cnn_mlp_forward.1} parent=1 // pred_check
      _
    $region35: #{cnn_mlp_forward.1} parent=1 // pred_check_branch
      %54 = sbr.rel (0) target = $region37
    $region36: #{cnn_mlp_forward.1} parent=1 // pred_region
      _
    $region37: #{cnn_mlp_forward.1} parent=1 // pred_fallthru
      _
    // Predicated region
    $region38: #{cnn_mlp_forward.1} parent=1 // pred_check
      _
    $region39: #{cnn_mlp_forward.1} parent=1 // pred_check_branch
      %56 = sbr.rel (0) target = $region41
    $region40: #{cnn_mlp_forward.1} parent=1 // pred_region
      _
    $region41: #{cnn_mlp_forward.1} parent=1 // pred_fallthru
      _
    // Predicated region
    $region42: #{cnn_mlp_forward.1} parent=1 // pred_check
      _
    $region43: #{cnn_mlp_forward.1} parent=1 // pred_check_branch
      %58 = sbr.rel (0) target = $region45
    $region44: #{cnn_mlp_forward.1} parent=1 // pred_region
      %s60 = ssub.s32 16, 16
      %61 = vsyncadd [#allocation5], %s60
      %s63 = sshll.u32 [#allocation6], 4
      %s64 = int_to_ptr.vmem [resolvable:$true] %s63
      %66 = dma.hbm_to_vmem [thread:$0]  %s10, 16, %s64, [#allocation5]
    $region45: #{cnn_mlp_forward.1} parent=1 // pred_fallthru
      _
    // Predicated region
    $region46: #{cnn_mlp_forward.1} parent=1 // pred_check
      _
    $region47: #{cnn_mlp_forward.1} parent=1 // pred_check_branch
      %68 = sbr.rel (0) target = $region49
    $region48: #{cnn_mlp_forward.1} parent=1 // pred_region
      _
    $region49: #{cnn_mlp_forward.1} parent=1 // pred_fallthru
      _
    // Predicated region
    $region50: #{cnn_mlp_forward.1} parent=1 // pred_check
      _
    $region51: #{cnn_mlp_forward.1} parent=1 // pred_check_branch
      %70 = sbr.rel (0) target = $region53
    $region52: #{cnn_mlp_forward.1} parent=1 // pred_region
      %71 = dma.done [#allocation3], 32
    $region53: #{cnn_mlp_forward.1} parent=1 // pred_fallthru
      _
    // Predicated region
    $region54: #{cnn_mlp_forward.1} parent=1 // pred_check
      _
    $region55: #{cnn_mlp_forward.1} parent=1 // pred_check_branch
      %73 = sbr.rel (0) target = $region57
    $region56: #{cnn_mlp_forward.1} parent=1 // pred_region
      %74 = dma.done [#allocation5], 10240
    $region57: #{cnn_mlp_forward.1} parent=1 // pred_fallthru
      _
    // Predicated region
    $region58: #{cnn_mlp_forward.1} parent=1 // pred_check
      _
    $region59: #{cnn_mlp_forward.1} parent=1 // pred_check_branch
      %76 = sbr.rel (0) target = $region61
    $region60: #{cnn_mlp_forward.1} parent=1 // pred_region
      %77 = dma.done [#allocation5], 16
    $region61: #{cnn_mlp_forward.1} parent=1 // pred_fallthru
      _
    %v79 = vld [vmem:[%s0] sm:$0xff]
    %v80 = vld [vmem:[%s0 + $0x8] sm:$0xff]
    %v81 = vld [vmem:[%s0 + $0x10] sm:$0xff]
    %v82 = vpack.c.bf16 %v79, %v79
    %v83 = vpack.c.bf16 %v80, %v80
    %v84 = vpack.c.bf16 %v81, %v81
    %v85 = vld [vmem:[%s1] sm:$0xff]
    %v86 = vld [vmem:[%s1 + $0x8] sm:$0xff]
    %v87 = vld [vmem:[%s1 + $0x10] sm:$0xff]
    %v88 = vld [vmem:[%s1 + $0x18] sm:$0xff]
    %v89 = vld [vmem:[%s1 + $0x20] sm:$0xff]
    %v90 = vld [vmem:[%s1 + $0x28] sm:$0xff]
    %v91 = vld [vmem:[%s1 + $0x30] sm:$0xff]
    %v92 = vld [vmem:[%s1 + $0x38] sm:$0xff]
    %v93 = vld [vmem:[%s1 + $0x40] sm:$0xff]
    %v94 = vld [vmem:[%s1 + $0x48] sm:$0xff]
    %v95 = vld [vmem:[%s1 + $0x50] sm:$0xff]
    %v96 = vld [vmem:[%s1 + $0x58] sm:$0xff]
    %v97 = vld [vmem:[%s1 + $0x60] sm:$0xff]
    %v98 = vld [vmem:[%s1 + $0x68] sm:$0xff]
    %v99 = vld [vmem:[%s1 + $0x70] sm:$0xff]
    %v100 = vld [vmem:[%s1 + $0x78] sm:$0xff]
    %v101 = vld [vmem:[%s1 + $0x80] sm:$0xff]
    %v102 = vld [vmem:[%s1 + $0x88] sm:$0xff]
    %v103 = vld [vmem:[%s1 + $0x90] sm:$0xff]
    %v104 = vld [vmem:[%s1 + $0x98] sm:$0xff]
    %v105 = vld [vmem:[%s1 + $0xa0] sm:$0xff]
    %v106 = vld [vmem:[%s1 + $0xa8] sm:$0xff]
    %v107 = vld [vmem:[%s1 + $0xb0] sm:$0xff]
    %v108 = vld [vmem:[%s1 + $0xb8] sm:$0xff]
    %v109 = vld [vmem:[%s1 + $0xc0] sm:$0xff]
    %v110 = vld [vmem:[%s1 + $0xc8] sm:$0xff]
    %v111 = vld [vmem:[%s1 + $0xd0] sm:$0xff]
    %v112 = vld [vmem:[%s1 + $0xd8] sm:$0xff]
    %v113 = vld [vmem:[%s1 + $0xe0] sm:$0xff]
    %v114 = vld [vmem:[%s1 + $0xe8] sm:$0xff]
    %v115 = vld [vmem:[%s1 + $0xf0] sm:$0xff]
    %v116 = vld [vmem:[%s1 + $0xf8] sm:$0xff]
    %v117 = vld [vmem:[%s1 + $0x100] sm:$0xff]
    %v118 = vld [vmem:[%s1 + $0x108] sm:$0xff]
    %v119 = vld [vmem:[%s1 + $0x110] sm:$0xff]
    %v120 = vld [vmem:[%s1 + $0x118] sm:$0xff]
    %v121 = vld [vmem:[%s1 + $0x120] sm:$0xff]
    %v122 = vld [vmem:[%s1 + $0x128] sm:$0xff]
    %v123 = vld [vmem:[%s1 + $0x130] sm:$0xff]
    %v124 = vld [vmem:[%s1 + $0x138] sm:$0xff]
    %v125 = vld [vmem:[%s1 + $0x140] sm:$0xff]
    %v126 = vld [vmem:[%s1 + $0x148] sm:$0xff]
    %v127 = vld [vmem:[%s1 + $0x150] sm:$0xff]
    %v128 = vld [vmem:[%s1 + $0x158] sm:$0xff]
    %v129 = vld [vmem:[%s1 + $0x160] sm:$0xff]
    %v130 = vld [vmem:[%s1 + $0x168] sm:$0xff]
    %v131 = vld [vmem:[%s1 + $0x170] sm:$0xff]
    %v132 = vld [vmem:[%s1 + $0x178] sm:$0xff]
    %v133 = vld [vmem:[#allocation2] sm:$0x3]
    %v135 = vlaneseq
    %v136 = vshrl.u32 %v135, 7
    %v137 = vsub.s32 0, %v136
    %v138 = vrot.slane %v133, %v137
    %v139 = vlaneseq
    %v140 = vshrl.u32 %v139, 7
    %v141 = vsub.s32 1, %v140
    %v142 = vrot.slane %v133, %v141
    %v193 = vunpack.c.l.b16 %v85
    %v194 = vunpack.c.h.b16 %v85
    %v195 = vunpack.c.l.b16 %v86
    %v196 = vunpack.c.h.b16 %v86
    %v197 = vunpack.c.l.b16 %v87
    %v198 = vunpack.c.h.b16 %v87
    %v199 = vunpack.c.l.b16 %v88
    %v200 = vunpack.c.h.b16 %v88
    %v201 = vunpack.c.l.b16 %v89
    %v202 = vunpack.c.h.b16 %v89
    %v203 = vunpack.c.l.b16 %v90
    %v204 = vunpack.c.h.b16 %v90
    %v205 = vunpack.c.l.b16 %v91
    %v206 = vunpack.c.h.b16 %v91
    %v207 = vunpack.c.l.b16 %v92
    %v208 = vunpack.c.h.b16 %v92
    %v209 = vunpack.c.l.b16 %v93
    %v210 = vunpack.c.h.b16 %v93
    %v211 = vunpack.c.l.b16 %v94
    %v212 = vunpack.c.h.b16 %v94
    %v213 = vunpack.c.l.b16 %v95
    %v214 = vunpack.c.h.b16 %v95
    %v215 = vunpack.c.l.b16 %v96
    %v216 = vunpack.c.h.b16 %v96
    %v217 = vunpack.c.l.b16 %v97
    %v218 = vunpack.c.h.b16 %v97
    %v219 = vunpack.c.l.b16 %v98
    %v220 = vunpack.c.h.b16 %v98
    %v221 = vunpack.c.l.b16 %v99
    %v222 = vunpack.c.h.b16 %v99
    %v223 = vunpack.c.l.b16 %v100
    %v224 = vunpack.c.h.b16 %v100
    %v225 = vunpack.c.l.b16 %v101
    %v226 = vunpack.c.h.b16 %v101
    %v227 = vunpack.c.l.b16 %v102
    %v228 = vunpack.c.h.b16 %v102
    %v229 = vunpack.c.l.b16 %v103
    %v230 = vunpack.c.h.b16 %v103
    %v231 = vunpack.c.l.b16 %v104
    %v232 = vunpack.c.h.b16 %v104
    %v233 = vunpack.c.l.b16 %v105
    %v234 = vunpack.c.h.b16 %v105
    %v235 = vunpack.c.l.b16 %v106
    %v236 = vunpack.c.h.b16 %v106
    %v237 = vunpack.c.l.b16 %v107
    %v238 = vunpack.c.h.b16 %v107
    %v239 = vunpack.c.l.b16 %v108
    %v240 = vunpack.c.h.b16 %v108
    %v241 = vunpack.c.l.b16 %v109
    %v242 = vunpack.c.h.b16 %v109
    %v243 = vunpack.c.l.b16 %v110
    %v244 = vunpack.c.h.b16 %v110
    %v245 = vunpack.c.l.b16 %v111
    %v246 = vunpack.c.h.b16 %v111
    %v247 = vunpack.c.l.b16 %v112
    %v248 = vunpack.c.h.b16 %v112
    %v249 = vunpack.c.l.b16 %v113
    %v250 = vunpack.c.h.b16 %v113
    %v251 = vunpack.c.l.b16 %v114
    %v252 = vunpack.c.h.b16 %v114
    %v253 = vunpack.c.l.b16 %v115
    %v254 = vunpack.c.h.b16 %v115
    %v255 = vunpack.c.l.b16 %v116
    %v256 = vunpack.c.h.b16 %v116
    %v257 = vunpack.c.l.b16 %v117
    %v258 = vunpack.c.h.b16 %v117
    %v259 = vunpack.c.l.b16 %v118
    %v260 = vunpack.c.h.b16 %v118
    %v261 = vunpack.c.l.b16 %v119
    %v262 = vunpack.c.h.b16 %v119
    %v263 = vunpack.c.l.b16 %v120
    %v264 = vunpack.c.h.b16 %v120
    %v265 = vunpack.c.l.b16 %v121
    %v266 = vunpack.c.h.b16 %v121
    %v267 = vunpack.c.l.b16 %v122
    %v268 = vunpack.c.h.b16 %v122
    %v269 = vunpack.c.l.b16 %v123
    %v270 = vunpack.c.h.b16 %v123
    %v271 = vunpack.c.l.b16 %v124
    %v272 = vunpack.c.h.b16 %v124
    %v273 = vunpack.c.l.b16 %v125
    %v274 = vunpack.c.h.b16 %v125
    %v275 = vunpack.c.l.b16 %v126
    %v276 = vunpack.c.h.b16 %v126
    %v277 = vunpack.c.l.b16 %v127
    %v278 = vunpack.c.h.b16 %v127
    %v279 = vunpack.c.l.b16 %v128
    %v280 = vunpack.c.h.b16 %v128
    %v281 = vunpack.c.l.b16 %v129
    %v282 = vunpack.c.h.b16 %v129
    %v283 = vunpack.c.l.b16 %v130
    %v284 = vunpack.c.h.b16 %v130
    %v285 = vunpack.c.l.b16 %v131
    %v286 = vunpack.c.h.b16 %v131
    %v287 = vunpack.c.l.b16 %v132
    %v288 = vunpack.c.h.b16 %v132
    %v289 = vpack.c.b16 %v195, %v193
    %v290 = vpack.c.b16 %v196, %v194
    %v291 = vpack.c.b16 %v199, %v197
    %v292 = vpack.c.b16 %v200, %v198
    %v293 = vpack.c.b16 %v203, %v201
    %v294 = vpack.c.b16 %v204, %v202
    %v295 = vpack.c.b16 %v207, %v205
    %v296 = vpack.c.b16 %v208, %v206
    %v297 = vpack.c.b16 %v211, %v209
    %v298 = vpack.c.b16 %v212, %v210
    %v299 = vpack.c.b16 %v215, %v213
    %v300 = vpack.c.b16 %v216, %v214
    %v301 = vpack.c.b16 %v219, %v217
    %v302 = vpack.c.b16 %v220, %v218
    %v303 = vpack.c.b16 %v223, %v221
    %v304 = vpack.c.b16 %v224, %v222
    %v305 = vpack.c.b16 %v227, %v225
    %v306 = vpack.c.b16 %v228, %v226
    %v307 = vpack.c.b16 %v231, %v229
    %v308 = vpack.c.b16 %v232, %v230
    %v309 = vpack.c.b16 %v235, %v233
    %v310 = vpack.c.b16 %v236, %v234
    %v311 = vpack.c.b16 %v239, %v237
    %v312 = vpack.c.b16 %v240, %v238
    %v313 = vpack.c.b16 %v243, %v241
    %v314 = vpack.c.b16 %v244, %v242
    %v315 = vpack.c.b16 %v247, %v245
    %v316 = vpack.c.b16 %v248, %v246
    %v317 = vpack.c.b16 %v251, %v249
    %v318 = vpack.c.b16 %v252, %v250
    %v319 = vpack.c.b16 %v255, %v253
    %v320 = vpack.c.b16 %v256, %v254
    %v321 = vpack.c.b16 %v259, %v257
    %v322 = vpack.c.b16 %v260, %v258
    %v323 = vpack.c.b16 %v263, %v261
    %v324 = vpack.c.b16 %v264, %v262
    %v325 = vpack.c.b16 %v267, %v265
    %v326 = vpack.c.b16 %v268, %v266
    %v327 = vpack.c.b16 %v271, %v269
    %v328 = vpack.c.b16 %v272, %v270
    %v329 = vpack.c.b16 %v275, %v273
    %v330 = vpack.c.b16 %v276, %v274
    %v331 = vpack.c.b16 %v279, %v277
    %v332 = vpack.c.b16 %v280, %v278
    %v333 = vpack.c.b16 %v283, %v281
    %v334 = vpack.c.b16 %v284, %v282
    %v335 = vpack.c.b16 %v287, %v285
    %v336 = vpack.c.b16 %v288, %v286
    %385 = vmatprep.subr.bf16.mxu0 %v290
    %386 = vmatpush1.bf16.msra.mxu0 %v289
    %387 = vmatprep.subr.bf16.mxu0 %v292
    %388 = vmatpush1.bf16.msra.mxu0 %v291
    %389 = vmatprep.subr.bf16.mxu0 %v294
    %390 = vmatpush1.bf16.msra.mxu0 %v293
    %391 = vmatprep.subr.bf16.mxu0 %v296
    %392 = vmatpush1.bf16.msra.mxu0 %v295
    %393 = vmatprep.subr.bf16.mxu0 %v298
    %394 = vmatpush1.bf16.msra.mxu0 %v297
    %395 = vmatprep.subr.bf16.mxu0 %v300
    %396 = vmatpush1.bf16.msra.mxu0 %v299
    %397 = vmatprep.subr.bf16.mxu0 %v302
    %398 = vmatpush1.bf16.msra.mxu0 %v301
    %399 = vmatprep.subr.bf16.mxu0 %v304
    %400 = vmatpush1.bf16.msra.mxu0 %v303
    %401 = vmatprep.subr.bf16.mxu0 %v306
    %402 = vmatpush1.bf16.msra.mxu0 %v305
    %403 = vmatprep.subr.bf16.mxu0 %v308
    %404 = vmatpush1.bf16.msra.mxu0 %v307
    %405 = vmatprep.subr.bf16.mxu0 %v310
    %406 = vmatpush1.bf16.msra.mxu0 %v309
    %407 = vmatprep.subr.bf16.mxu0 %v312
    %408 = vmatpush1.bf16.msra.mxu0 %v311
    %409 = vmatprep.subr.bf16.mxu0 %v314
    %410 = vmatpush1.bf16.msra.mxu0 %v313
    %411 = vmatprep.subr.bf16.mxu0 %v316
    %412 = vmatpush1.bf16.msra.mxu0 %v315
    %413 = vmatprep.subr.bf16.mxu0 %v318
    %414 = vmatpush1.bf16.msra.mxu0 %v317
    %415 = vmatprep.subr.bf16.mxu0 %v320
    %416 = vmatpush1.bf16.msra.mxu0 %v319
    %417 = vmatprep.mubr.bf16.mxu0 %v83
    %418 = vmatmul.mubr.bf16.gmra.mrb[0].mxu0 %v82
    %v419 = vpop.f32.mrb[0].mxu0
    %v420 = vadd.f32 %v138, %v419
    %v421 = vpop.f32.mrb[0].mxu0
    %v422 = vadd.f32 %v142, %v421
    %v423 = vpop.f32.mrb[0].mxu0
    %v424 = vpop.f32.mrb[0].mxu0
    %425 = vdwg.mxu0
    %426 = vmatprep.subr.bf16.mxu0 %v322
    %427 = vmatpush1.bf16.msra.mxu0 %v321
    %428 = vmatprep.subr.bf16.mxu0 %v324
    %429 = vmatpush1.bf16.msra.mxu0 %v323
    %430 = vmatprep.subr.bf16.mxu0 %v326
    %431 = vmatpush1.bf16.msra.mxu0 %v325
    %432 = vmatprep.subr.bf16.mxu0 %v328
    %433 = vmatpush1.bf16.msra.mxu0 %v327
    %434 = vmatprep.subr.bf16.mxu0 %v330
    %435 = vmatpush1.bf16.msra.mxu0 %v329
    %436 = vmatprep.subr.bf16.mxu0 %v332
    %437 = vmatpush1.bf16.msra.mxu0 %v331
    %438 = vmatprep.subr.bf16.mxu0 %v334
    %439 = vmatpush1.bf16.msra.mxu0 %v333
    %440 = vmatprep.subr.bf16.mxu0 %v336
    %441 = vmatpush1.bf16.msra.mxu0 %v335
    %442 = vmatprep.subr.bf16.mxu0 0
    %443 = vmatpush1.bf16.msra.mxu0 0
    %444 = vmatprep.subr.bf16.mxu0 0
    %445 = vmatpush1.bf16.msra.mxu0 0
    %446 = vmatprep.subr.bf16.mxu0 0
    %447 = vmatpush1.bf16.msra.mxu0 0
    %448 = vmatprep.subr.bf16.mxu0 0
    %449 = vmatpush1.bf16.msra.mxu0 0
    %450 = vmatprep.subr.bf16.mxu0 0
    %451 = vmatpush1.bf16.msra.mxu0 0
    %452 = vmatprep.subr.bf16.mxu0 0
    %453 = vmatpush1.bf16.msra.mxu0 0
    %454 = vmatprep.subr.bf16.mxu0 0
    %455 = vmatpush1.bf16.msra.mxu0 0
    %456 = vmatprep.subr.bf16.mxu0 0
    %457 = vmatpush1.bf16.msra.mxu0 0
    %458 = vmatprep.mubr.bf16.mxu0 0
    %459 = vmatmul.mubr.bf16.gmra.mrb[0].mxu0 %v84
    %v460 = vpop.f32.mrb[0].mxu0
    %v461 = vadd.f32 %v420, %v460
    %v462 = vpop.f32.mrb[0].mxu0
    %v463 = vadd.f32 %v422, %v462
    %v464 = vpop.f32.mrb[0].mxu0
    %v465 = vpop.f32.mrb[0].mxu0
    %466 = vdwg.mxu0
    %v467 = vmax.f32 %v461, 0.0
    %v468 = vmax.f32 %v463, 0.0
    %v469 = vpack.c.bf16 %v467, %v467
    %v470 = vpack.c.bf16 %v468, %v468
    %v471 = vld [vmem:[#allocation4] sm:$0xff]
    %v472 = vld [vmem:[#allocation4 + $0x8] sm:$0xff]
    %v473 = vld [vmem:[#allocation4 + $0x10] sm:$0xf]
    %v474 = vld [vmem:[#allocation4 + $0x14] sm:$0xff]
    %v475 = vld [vmem:[#allocation4 + $0x1c] sm:$0xff]
    %v476 = vld [vmem:[#allocation4 + $0x24] sm:$0xf]
    %v477 = vld [vmem:[#allocation4 + $0x28] sm:$0xff]
    %v478 = vld [vmem:[#allocation4 + $0x30] sm:$0xff]
    %v479 = vld [vmem:[#allocation4 + $0x38] sm:$0xf]
    %v480 = vld [vmem:[#allocation4 + $0x3c] sm:$0xff]
    %v481 = vld [vmem:[#allocation4 + $0x44] sm:$0xff]
    %v482 = vld [vmem:[#allocation4 + $0x4c] sm:$0xf]
    %v483 = vld [vmem:[#allocation4 + $0x50] sm:$0xff]
    %v484 = vld [vmem:[#allocation4 + $0x58] sm:$0xff]
    %v485 = vld [vmem:[#allocation4 + $0x60] sm:$0xf]
    %v486 = vld [vmem:[#allocation4 + $0x64] sm:$0xff]
    %v487 = vld [vmem:[#allocation4 + $0x6c] sm:$0xff]
    %v488 = vld [vmem:[#allocation4 + $0x74] sm:$0xf]
    %v489 = vld [vmem:[#allocation4 + $0x78] sm:$0xff]
    %v490 = vld [vmem:[#allocation4 + $0x80] sm:$0xff]
    %v491 = vld [vmem:[#allocation4 + $0x88] sm:$0xf]
    %v492 = vld [vmem:[#allocation4 + $0x8c] sm:$0xff]
    %v493 = vld [vmem:[#allocation4 + $0x94] sm:$0xff]
    %v494 = vld [vmem:[#allocation4 + $0x9c] sm:$0xf]
    %v495 = vld [vmem:[#allocation4 + $0xa0] sm:$0xff]
    %v496 = vld [vmem:[#allocation4 + $0xa8] sm:$0xff]
    %v497 = vld [vmem:[#allocation4 + $0xb0] sm:$0xf]
    %v498 = vld [vmem:[#allocation4 + $0xb4] sm:$0xff]
    %v499 = vld [vmem:[#allocation4 + $0xbc] sm:$0xff]
    %v500 = vld [vmem:[#allocation4 + $0xc4] sm:$0xf]
    %v501 = vld [vmem:[#allocation4 + $0xc8] sm:$0xff]
    %v502 = vld [vmem:[#allocation4 + $0xd0] sm:$0xff]
    %v503 = vld [vmem:[#allocation4 + $0xd8] sm:$0xf]
    %v504 = vld [vmem:[#allocation4 + $0xdc] sm:$0xff]
    %v505 = vld [vmem:[#allocation4 + $0xe4] sm:$0xff]
    %v506 = vld [vmem:[#allocation4 + $0xec] sm:$0xf]
    %v507 = vld [vmem:[#allocation4 + $0xf0] sm:$0xff]
    %v508 = vld [vmem:[#allocation4 + $0xf8] sm:$0xff]
    %v509 = vld [vmem:[#allocation4 + $0x100] sm:$0xf]
    %v510 = vld [vmem:[#allocation4 + $0x104] sm:$0xff]
    %v511 = vld [vmem:[#allocation4 + $0x10c] sm:$0xff]
    %v512 = vld [vmem:[#allocation4 + $0x114] sm:$0xf]
    %v513 = vld [vmem:[#allocation4 + $0x118] sm:$0xff]
    %v514 = vld [vmem:[#allocation4 + $0x120] sm:$0xff]
    %v515 = vld [vmem:[#allocation4 + $0x128] sm:$0xf]
    %v516 = vld [vmem:[#allocation4 + $0x12c] sm:$0xff]
    %v517 = vld [vmem:[#allocation4 + $0x134] sm:$0xff]
    %v518 = vld [vmem:[#allocation4 + $0x13c] sm:$0xf]
    %v519 = vld [vmem:[#allocation4 + $0x140] sm:$0xff]
    %v520 = vld [vmem:[#allocation4 + $0x148] sm:$0xff]
    %v521 = vld [vmem:[#allocation4 + $0x150] sm:$0xf]
    %v522 = vld [vmem:[#allocation4 + $0x154] sm:$0xff]
    %v523 = vld [vmem:[#allocation4 + $0x15c] sm:$0xff]
    %v524 = vld [vmem:[#allocation4 + $0x164] sm:$0xf]
    %v525 = vld [vmem:[#allocation4 + $0x168] sm:$0xff]
    %v526 = vld [vmem:[#allocation4 + $0x170] sm:$0xff]
    %v527 = vld [vmem:[#allocation4 + $0x178] sm:$0xf]
    %v528 = vld [vmem:[#allocation4 + $0x17c] sm:$0xff]
    %v529 = vld [vmem:[#allocation4 + $0x184] sm:$0xff]
    %v530 = vld [vmem:[#allocation4 + $0x18c] sm:$0xf]
    %v531 = vld [vmem:[#allocation4 + $0x190] sm:$0xff]
    %v532 = vld [vmem:[#allocation4 + $0x198] sm:$0xff]
    %v533 = vld [vmem:[#allocation4 + $0x1a0] sm:$0xf]
    %v534 = vld [vmem:[#allocation4 + $0x1a4] sm:$0xff]
    %v535 = vld [vmem:[#allocation4 + $0x1ac] sm:$0xff]
    %v536 = vld [vmem:[#allocation4 + $0x1b4] sm:$0xf]
    %v537 = vld [vmem:[#allocation4 + $0x1b8] sm:$0xff]
    %v538 = vld [vmem:[#allocation4 + $0x1c0] sm:$0xff]
    %v539 = vld [vmem:[#allocation4 + $0x1c8] sm:$0xf]
    %v540 = vld [vmem:[#allocation4 + $0x1cc] sm:$0xff]
    %v541 = vld [vmem:[#allocation4 + $0x1d4] sm:$0xff]
    %v542 = vld [vmem:[#allocation4 + $0x1dc] sm:$0xf]
    %v543 = vld [vmem:[#allocation4 + $0x1e0] sm:$0xff]
    %v544 = vld [vmem:[#allocation4 + $0x1e8] sm:$0xff]
    %v545 = vld [vmem:[#allocation4 + $0x1f0] sm:$0xf]
    %v546 = vld [vmem:[#allocation4 + $0x1f4] sm:$0xff]
    %v547 = vld [vmem:[#allocation4 + $0x1fc] sm:$0xff]
    %v548 = vld [vmem:[#allocation4 + $0x204] sm:$0xf]
    %v549 = vld [vmem:[#allocation4 + $0x208] sm:$0xff]
    %v550 = vld [vmem:[#allocation4 + $0x210] sm:$0xff]
    %v551 = vld [vmem:[#allocation4 + $0x218] sm:$0xf]
    %v552 = vld [vmem:[#allocation4 + $0x21c] sm:$0xff]
    %v553 = vld [vmem:[#allocation4 + $0x224] sm:$0xff]
    %v554 = vld [vmem:[#allocation4 + $0x22c] sm:$0xf]
    %v555 = vld [vmem:[#allocation4 + $0x230] sm:$0xff]
    %v556 = vld [vmem:[#allocation4 + $0x238] sm:$0xff]
    %v557 = vld [vmem:[#allocation4 + $0x240] sm:$0xf]
    %v558 = vld [vmem:[#allocation4 + $0x244] sm:$0xff]
    %v559 = vld [vmem:[#allocation4 + $0x24c] sm:$0xff]
    %v560 = vld [vmem:[#allocation4 + $0x254] sm:$0xf]
    %v561 = vld [vmem:[#allocation4 + $0x258] sm:$0xff]
    %v562 = vld [vmem:[#allocation4 + $0x260] sm:$0xff]
    %v563 = vld [vmem:[#allocation4 + $0x268] sm:$0xf]
    %v564 = vld [vmem:[#allocation4 + $0x26c] sm:$0xff]
    %v565 = vld [vmem:[#allocation4 + $0x274] sm:$0xff]
    %v566 = vld [vmem:[#allocation4 + $0x27c] sm:$0xf]
    %v567 = vld [vmem:[%s4] sm:$0x1f]
    %v569 = vlaneseq
    %v570 = vshrl.u32 %v569, 7
    %v571 = vsub.s32 0, %v570
    %v572 = vrot.slane %v567, %v571
    %v573 = vlaneseq
    %v574 = vshrl.u32 %v573, 7
    %v575 = vsub.s32 1, %v574
    %v576 = vrot.slane %v567, %v575
    %v577 = vlaneseq
    %v578 = vshrl.u32 %v577, 7
    %v579 = vsub.s32 2, %v578
    %v580 = vrot.slane %v567, %v579
    %v581 = vlaneseq
    %v582 = vshrl.u32 %v581, 7
    %v583 = vsub.s32 3, %v582
    %v584 = vrot.slane %v567, %v583
    %v585 = vlaneseq
    %v586 = vshrl.u32 %v585, 7
    %v587 = vsub.s32 4, %v586
    %v588 = vrot.slane %v567, %v587
    %v690 = vunpack.c.l.b16 %v471
    %v691 = vunpack.c.h.b16 %v471
    %v692 = vunpack.c.l.b16 %v472
    %v693 = vunpack.c.h.b16 %v472
    %v694 = vunpack.c.l.b16 %v473
    %v695 = vunpack.c.l.b16 %v474
    %v696 = vunpack.c.h.b16 %v474
    %v697 = vunpack.c.l.b16 %v475
    %v698 = vunpack.c.h.b16 %v475
    %v699 = vunpack.c.l.b16 %v476
    %v700 = vunpack.c.l.b16 %v477
    %v701 = vunpack.c.h.b16 %v477
    %v702 = vunpack.c.l.b16 %v478
    %v703 = vunpack.c.h.b16 %v478
    %v704 = vunpack.c.l.b16 %v479
    %v705 = vunpack.c.l.b16 %v480
    %v706 = vunpack.c.h.b16 %v480
    %v707 = vunpack.c.l.b16 %v481
    %v708 = vunpack.c.h.b16 %v481
    %v709 = vunpack.c.l.b16 %v482
    %v710 = vunpack.c.l.b16 %v483
    %v711 = vunpack.c.h.b16 %v483
    %v712 = vunpack.c.l.b16 %v484
    %v713 = vunpack.c.h.b16 %v484
    %v714 = vunpack.c.l.b16 %v485
    %v715 = vunpack.c.l.b16 %v486
    %v716 = vunpack.c.h.b16 %v486
    %v717 = vunpack.c.l.b16 %v487
    %v718 = vunpack.c.h.b16 %v487
    %v719 = vunpack.c.l.b16 %v488
    %v720 = vunpack.c.l.b16 %v489
    %v721 = vunpack.c.h.b16 %v489
    %v722 = vunpack.c.l.b16 %v490
    %v723 = vunpack.c.h.b16 %v490
    %v724 = vunpack.c.l.b16 %v491
    %v725 = vunpack.c.l.b16 %v492
    %v726 = vunpack.c.h.b16 %v492
    %v727 = vunpack.c.l.b16 %v493
    %v728 = vunpack.c.h.b16 %v493
    %v729 = vunpack.c.l.b16 %v494
    %v730 = vunpack.c.l.b16 %v495
    %v731 = vunpack.c.h.b16 %v495
    %v732 = vunpack.c.l.b16 %v496
    %v733 = vunpack.c.h.b16 %v496
    %v734 = vunpack.c.l.b16 %v497
    %v735 = vunpack.c.l.b16 %v498
    %v736 = vunpack.c.h.b16 %v498
    %v737 = vunpack.c.l.b16 %v499
    %v738 = vunpack.c.h.b16 %v499
    %v739 = vunpack.c.l.b16 %v500
    %v740 = vunpack.c.l.b16 %v501
    %v741 = vunpack.c.h.b16 %v501
    %v742 = vunpack.c.l.b16 %v502
    %v743 = vunpack.c.h.b16 %v502
    %v744 = vunpack.c.l.b16 %v503
    %v745 = vunpack.c.l.b16 %v504
    %v746 = vunpack.c.h.b16 %v504
    %v747 = vunpack.c.l.b16 %v505
    %v748 = vunpack.c.h.b16 %v505
    %v749 = vunpack.c.l.b16 %v506
    %v750 = vunpack.c.l.b16 %v507
    %v751 = vunpack.c.h.b16 %v507
    %v752 = vunpack.c.l.b16 %v508
    %v753 = vunpack.c.h.b16 %v508
    %v754 = vunpack.c.l.b16 %v509
    %v755 = vunpack.c.l.b16 %v510
    %v756 = vunpack.c.h.b16 %v510
    %v757 = vunpack.c.l.b16 %v511
    %v758 = vunpack.c.h.b16 %v511
    %v759 = vunpack.c.l.b16 %v512
    %v760 = vunpack.c.l.b16 %v513
    %v761 = vunpack.c.h.b16 %v513
    %v762 = vunpack.c.l.b16 %v514
    %v763 = vunpack.c.h.b16 %v514
    %v764 = vunpack.c.l.b16 %v515
    %v765 = vunpack.c.l.b16 %v516
    %v766 = vunpack.c.h.b16 %v516
    %v767 = vunpack.c.l.b16 %v517
    %v768 = vunpack.c.h.b16 %v517
    %v769 = vunpack.c.l.b16 %v518
    %v770 = vunpack.c.l.b16 %v519
    %v771 = vunpack.c.h.b16 %v519
    %v772 = vunpack.c.l.b16 %v520
    %v773 = vunpack.c.h.b16 %v520
    %v774 = vunpack.c.l.b16 %v521
    %v775 = vunpack.c.l.b16 %v522
    %v776 = vunpack.c.h.b16 %v522
    %v777 = vunpack.c.l.b16 %v523
    %v778 = vunpack.c.h.b16 %v523
    %v779 = vunpack.c.l.b16 %v524
    %v780 = vunpack.c.l.b16 %v525
    %v781 = vunpack.c.h.b16 %v525
    %v782 = vunpack.c.l.b16 %v526
    %v783 = vunpack.c.h.b16 %v526
    %v784 = vunpack.c.l.b16 %v527
    %v785 = vunpack.c.l.b16 %v528
    %v786 = vunpack.c.h.b16 %v528
    %v787 = vunpack.c.l.b16 %v529
    %v788 = vunpack.c.h.b16 %v529
    %v789 = vunpack.c.l.b16 %v530
    %v790 = vunpack.c.l.b16 %v531
    %v791 = vunpack.c.h.b16 %v531
    %v792 = vunpack.c.l.b16 %v532
    %v793 = vunpack.c.h.b16 %v532
    %v794 = vunpack.c.l.b16 %v533
    %v795 = vunpack.c.l.b16 %v534
    %v796 = vunpack.c.h.b16 %v534
    %v797 = vunpack.c.l.b16 %v535
    %v798 = vunpack.c.h.b16 %v535
    %v799 = vunpack.c.l.b16 %v536
    %v800 = vunpack.c.l.b16 %v537
    %v801 = vunpack.c.h.b16 %v537
    %v802 = vunpack.c.l.b16 %v538
    %v803 = vunpack.c.h.b16 %v538
    %v804 = vunpack.c.l.b16 %v539
    %v805 = vunpack.c.l.b16 %v540
    %v806 = vunpack.c.h.b16 %v540
    %v807 = vunpack.c.l.b16 %v541
    %v808 = vunpack.c.h.b16 %v541
    %v809 = vunpack.c.l.b16 %v542
    %v810 = vunpack.c.l.b16 %v543
    %v811 = vunpack.c.h.b16 %v543
    %v812 = vunpack.c.l.b16 %v544
    %v813 = vunpack.c.h.b16 %v544
    %v814 = vunpack.c.l.b16 %v545
    %v815 = vunpack.c.l.b16 %v546
    %v816 = vunpack.c.h.b16 %v546
    %v817 = vunpack.c.l.b16 %v547
    %v818 = vunpack.c.h.b16 %v547
    %v819 = vunpack.c.l.b16 %v548
    %v820 = vunpack.c.l.b16 %v549
    %v821 = vunpack.c.h.b16 %v549
    %v822 = vunpack.c.l.b16 %v550
    %v823 = vunpack.c.h.b16 %v550
    %v824 = vunpack.c.l.b16 %v551
    %v825 = vunpack.c.l.b16 %v552
    %v826 = vunpack.c.h.b16 %v552
    %v827 = vunpack.c.l.b16 %v553
    %v828 = vunpack.c.h.b16 %v553
    %v829 = vunpack.c.l.b16 %v554
    %v830 = vunpack.c.l.b16 %v555
    %v831 = vunpack.c.h.b16 %v555
    %v832 = vunpack.c.l.b16 %v556
    %v833 = vunpack.c.h.b16 %v556
    %v834 = vunpack.c.l.b16 %v557
    %v835 = vunpack.c.l.b16 %v558
    %v836 = vunpack.c.h.b16 %v558
    %v837 = vunpack.c.l.b16 %v559
    %v838 = vunpack.c.h.b16 %v559
    %v839 = vunpack.c.l.b16 %v560
    %v840 = vunpack.c.l.b16 %v561
    %v841 = vunpack.c.h.b16 %v561
    %v842 = vunpack.c.l.b16 %v562
    %v843 = vunpack.c.h.b16 %v562
    %v844 = vunpack.c.l.b16 %v563
    %v845 = vunpack.c.l.b16 %v564
    %v846 = vunpack.c.h.b16 %v564
    %v847 = vunpack.c.l.b16 %v565
    %v848 = vunpack.c.h.b16 %v565
    %v849 = vunpack.c.l.b16 %v566
    %v850 = vpack.c.b16 %v695, %v690
    %v851 = vpack.c.b16 %v696, %v691
    %v852 = vpack.c.b16 %v697, %v692
    %v853 = vpack.c.b16 %v698, %v693
    %v854 = vpack.c.b16 %v699, %v694
    %v855 = vpack.c.b16 %v705, %v700
    %v856 = vpack.c.b16 %v706, %v701
    %v857 = vpack.c.b16 %v707, %v702
    %v858 = vpack.c.b16 %v708, %v703
    %v859 = vpack.c.b16 %v709, %v704
    %v860 = vpack.c.b16 %v715, %v710
    %v861 = vpack.c.b16 %v716, %v711
    %v862 = vpack.c.b16 %v717, %v712
    %v863 = vpack.c.b16 %v718, %v713
    %v864 = vpack.c.b16 %v719, %v714
    %v865 = vpack.c.b16 %v725, %v720
    %v866 = vpack.c.b16 %v726, %v721
    %v867 = vpack.c.b16 %v727, %v722
    %v868 = vpack.c.b16 %v728, %v723
    %v869 = vpack.c.b16 %v729, %v724
    %v870 = vpack.c.b16 %v735, %v730
    %v871 = vpack.c.b16 %v736, %v731
    %v872 = vpack.c.b16 %v737, %v732
    %v873 = vpack.c.b16 %v738, %v733
    %v874 = vpack.c.b16 %v739, %v734
    %v875 = vpack.c.b16 %v745, %v740
    %v876 = vpack.c.b16 %v746, %v741
    %v877 = vpack.c.b16 %v747, %v742
    %v878 = vpack.c.b16 %v748, %v743
    %v879 = vpack.c.b16 %v749, %v744
    %v880 = vpack.c.b16 %v755, %v750
    %v881 = vpack.c.b16 %v756, %v751
    %v882 = vpack.c.b16 %v757, %v752
    %v883 = vpack.c.b16 %v758, %v753
    %v884 = vpack.c.b16 %v759, %v754
    %v885 = vpack.c.b16 %v765, %v760
    %v886 = vpack.c.b16 %v766, %v761
    %v887 = vpack.c.b16 %v767, %v762
    %v888 = vpack.c.b16 %v768, %v763
    %v889 = vpack.c.b16 %v769, %v764
    %v890 = vpack.c.b16 %v775, %v770
    %v891 = vpack.c.b16 %v776, %v771
    %v892 = vpack.c.b16 %v777, %v772
    %v893 = vpack.c.b16 %v778, %v773
    %v894 = vpack.c.b16 %v779, %v774
    %v895 = vpack.c.b16 %v785, %v780
    %v896 = vpack.c.b16 %v786, %v781
    %v897 = vpack.c.b16 %v787, %v782
    %v898 = vpack.c.b16 %v788, %v783
    %v899 = vpack.c.b16 %v789, %v784
    %v900 = vpack.c.b16 %v795, %v790
    %v901 = vpack.c.b16 %v796, %v791
    %v902 = vpack.c.b16 %v797, %v792
    %v903 = vpack.c.b16 %v798, %v793
    %v904 = vpack.c.b16 %v799, %v794
    %v905 = vpack.c.b16 %v805, %v800
    %v906 = vpack.c.b16 %v806, %v801
    %v907 = vpack.c.b16 %v807, %v802
    %v908 = vpack.c.b16 %v808, %v803
    %v909 = vpack.c.b16 %v809, %v804
    %v910 = vpack.c.b16 %v815, %v810
    %v911 = vpack.c.b16 %v816, %v811
    %v912 = vpack.c.b16 %v817, %v812
    %v913 = vpack.c.b16 %v818, %v813
    %v914 = vpack.c.b16 %v819, %v814
    %v915 = vpack.c.b16 %v825, %v820
    %v916 = vpack.c.b16 %v826, %v821
    %v917 = vpack.c.b16 %v827, %v822
    %v918 = vpack.c.b16 %v828, %v823
    %v919 = vpack.c.b16 %v829, %v824
    %v920 = vpack.c.b16 %v835, %v830
    %v921 = vpack.c.b16 %v836, %v831
    %v922 = vpack.c.b16 %v837, %v832
    %v923 = vpack.c.b16 %v838, %v833
    %v924 = vpack.c.b16 %v839, %v834
    %v925 = vpack.c.b16 %v845, %v840
    %v926 = vpack.c.b16 %v846, %v841
    %v927 = vpack.c.b16 %v847, %v842
    %v928 = vpack.c.b16 %v848, %v843
    %v929 = vpack.c.b16 %v849, %v844
    %1010 = vmatprep.subr.bf16.mxu0 %v851
    %1011 = vmatpush1.bf16.msra.mxu0 %v850
    %1012 = vmatprep.subr.bf16.mxu0 %v856
    %1013 = vmatpush1.bf16.msra.mxu0 %v855
    %1014 = vmatprep.subr.bf16.mxu0 %v861
    %1015 = vmatpush1.bf16.msra.mxu0 %v860
    %1016 = vmatprep.subr.bf16.mxu0 %v866
    %1017 = vmatpush1.bf16.msra.mxu0 %v865
    %1018 = vmatprep.subr.bf16.mxu0 %v871
    %1019 = vmatpush1.bf16.msra.mxu0 %v870
    %1020 = vmatprep.subr.bf16.mxu0 %v876
    %1021 = vmatpush1.bf16.msra.mxu0 %v875
    %1022 = vmatprep.subr.bf16.mxu0 %v881
    %1023 = vmatpush1.bf16.msra.mxu0 %v880
    %1024 = vmatprep.subr.bf16.mxu0 %v886
    %1025 = vmatpush1.bf16.msra.mxu0 %v885
    %1026 = vmatprep.subr.bf16.mxu0 %v891
    %1027 = vmatpush1.bf16.msra.mxu0 %v890
    %1028 = vmatprep.subr.bf16.mxu0 %v896
    %1029 = vmatpush1.bf16.msra.mxu0 %v895
    %1030 = vmatprep.subr.bf16.mxu0 %v901
    %1031 = vmatpush1.bf16.msra.mxu0 %v900
    %1032 = vmatprep.subr.bf16.mxu0 %v906
    %1033 = vmatpush1.bf16.msra.mxu0 %v905
    %1034 = vmatprep.subr.bf16.mxu0 %v911
    %1035 = vmatpush1.bf16.msra.mxu0 %v910
    %1036 = vmatprep.subr.bf16.mxu0 %v916
    %1037 = vmatpush1.bf16.msra.mxu0 %v915
    %1038 = vmatprep.subr.bf16.mxu0 %v921
    %1039 = vmatpush1.bf16.msra.mxu0 %v920
    %1040 = vmatprep.subr.bf16.mxu0 %v926
    %1041 = vmatpush1.bf16.msra.mxu0 %v925
    %1042 = vmatprep.mubr.bf16.mxu0 %v470
    %1043 = vmatmul.mubr.bf16.gmra.mrb[0].mxu0 %v469
    %v1044 = vpop.f32.mrb[0].mxu0
    %v1045 = vadd.f32 %v572, %v1044
    %v1046 = vpop.f32.mrb[0].mxu0
    %v1047 = vadd.f32 %v576, %v1046
    %v1048 = vpop.f32.mrb[0].mxu0
    %v1049 = vpop.f32.mrb[0].mxu0
    %1050 = vdwg.mxu0
    %1051 = vmatprep.subr.bf16.mxu0 %v853
    %1052 = vmatpush1.bf16.msra.mxu0 %v852
    %1053 = vmatprep.subr.bf16.mxu0 %v858
    %1054 = vmatpush1.bf16.msra.mxu0 %v857
    %1055 = vmatprep.subr.bf16.mxu0 %v863
    %1056 = vmatpush1.bf16.msra.mxu0 %v862
    %1057 = vmatprep.subr.bf16.mxu0 %v868
    %1058 = vmatpush1.bf16.msra.mxu0 %v867
    %1059 = vmatprep.subr.bf16.mxu0 %v873
    %1060 = vmatpush1.bf16.msra.mxu0 %v872
    %1061 = vmatprep.subr.bf16.mxu0 %v878
    %1062 = vmatpush1.bf16.msra.mxu0 %v877
    %1063 = vmatprep.subr.bf16.mxu0 %v883
    %1064 = vmatpush1.bf16.msra.mxu0 %v882
    %1065 = vmatprep.subr.bf16.mxu0 %v888
    %1066 = vmatpush1.bf16.msra.mxu0 %v887
    %1067 = vmatprep.subr.bf16.mxu0 %v893
    %1068 = vmatpush1.bf16.msra.mxu0 %v892
    %1069 = vmatprep.subr.bf16.mxu0 %v898
    %1070 = vmatpush1.bf16.msra.mxu0 %v897
    %1071 = vmatprep.subr.bf16.mxu0 %v903
    %1072 = vmatpush1.bf16.msra.mxu0 %v902
    %1073 = vmatprep.subr.bf16.mxu0 %v908
    %1074 = vmatpush1.bf16.msra.mxu0 %v907
    %1075 = vmatprep.subr.bf16.mxu0 %v913
    %1076 = vmatpush1.bf16.msra.mxu0 %v912
    %1077 = vmatprep.subr.bf16.mxu0 %v918
    %1078 = vmatpush1.bf16.msra.mxu0 %v917
    %1079 = vmatprep.subr.bf16.mxu0 %v923
    %1080 = vmatpush1.bf16.msra.mxu0 %v922
    %1081 = vmatprep.subr.bf16.mxu0 %v928
    %1082 = vmatpush1.bf16.msra.mxu0 %v927
    %1083 = vmatprep.mubr.bf16.mxu0 %v470
    %1084 = vmatmul.mubr.bf16.gmra.mrb[0].mxu0 %v469
    %v1085 = vpop.f32.mrb[0].mxu0
    %v1086 = vadd.f32 %v580, %v1085
    %v1087 = vpop.f32.mrb[0].mxu0
    %v1088 = vadd.f32 %v584, %v1087
    %v1089 = vpop.f32.mrb[0].mxu0
    %v1090 = vpop.f32.mrb[0].mxu0
    %1091 = vdwg.mxu0
    %1092 = vmatprep.subr.bf16.mxu0 0
    %1093 = vmatpush1.bf16.msra.mxu0 %v854
    %1094 = vmatprep.subr.bf16.mxu0 0
    %1095 = vmatpush1.bf16.msra.mxu0 %v859
    %1096 = vmatprep.subr.bf16.mxu0 0
    %1097 = vmatpush1.bf16.msra.mxu0 %v864
    %1098 = vmatprep.subr.bf16.mxu0 0
    %1099 = vmatpush1.bf16.msra.mxu0 %v869
    %1100 = vmatprep.subr.bf16.mxu0 0
    %1101 = vmatpush1.bf16.msra.mxu0 %v874
    %1102 = vmatprep.subr.bf16.mxu0 0
    %1103 = vmatpush1.bf16.msra.mxu0 %v879
    %1104 = vmatprep.subr.bf16.mxu0 0
    %1105 = vmatpush1.bf16.msra.mxu0 %v884
    %1106 = vmatprep.subr.bf16.mxu0 0
    %1107 = vmatpush1.bf16.msra.mxu0 %v889
    %1108 = vmatprep.subr.bf16.mxu0 0
    %1109 = vmatpush1.bf16.msra.mxu0 %v894
    %1110 = vmatprep.subr.bf16.mxu0 0
    %1111 = vmatpush1.bf16.msra.mxu0 %v899
    %1112 = vmatprep.subr.bf16.mxu0 0
    %1113 = vmatpush1.bf16.msra.mxu0 %v904
    %1114 = vmatprep.subr.bf16.mxu0 0
    %1115 = vmatpush1.bf16.msra.mxu0 %v909
    %1116 = vmatprep.subr.bf16.mxu0 0
    %1117 = vmatpush1.bf16.msra.mxu0 %v914
    %1118 = vmatprep.subr.bf16.mxu0 0
    %1119 = vmatpush1.bf16.msra.mxu0 %v919
    %1120 = vmatprep.subr.bf16.mxu0 0
    %1121 = vmatpush1.bf16.msra.mxu0 %v924
    %1122 = vmatprep.subr.bf16.mxu0 0
    %1123 = vmatpush1.bf16.msra.mxu0 %v929
    %1124 = vmatprep.mubr.bf16.mxu0 %v470
    %1125 = vmatmul.mubr.bf16.gmra.mrb[0].mxu0 %v469
    %v1126 = vpop.f32.mrb[0].mxu0
    %v1127 = vadd.f32 %v588, %v1126
    %v1128 = vpop.f32.mrb[0].mxu0
    %v1129 = vpop.f32.mrb[0].mxu0
    %v1130 = vpop.f32.mrb[0].mxu0
    %1131 = vdwg.mxu0
    %v1132 = vmax.f32 %v1045, 0.0
    %v1133 = vmax.f32 %v1047, 0.0
    %v1134 = vmax.f32 %v1086, 0.0
    %v1135 = vmax.f32 %v1088, 0.0
    %v1136 = vmax.f32 %v1127, 0.0
    %v1137 = vmax.f32 %v1132, %v1133
    %v1138 = vmax.f32 %v1137, %v1134
    %v1139 = vmax.f32 %v1138, %v1135
    %v1140 = vmax.f32 %v1139, %v1136
    %v1141 = vld [vmem:[%s5] sm:$0xff]
    %v1142 = vld [vmem:[%s5 + $0x8] sm:$0xff]
    %v1143 = vld [vmem:[%s5 + $0x10] sm:$0xff]
    %v1144 = vld [vmem:[%s5 + $0x18] sm:$0xff]
    %v1145 = vld [vmem:[%s5 + $0x20] sm:$0xff]
    %v1146 = vld [vmem:[%s5 + $0x28] sm:$0xff]
    %v1147 = vld [vmem:[%s5 + $0x30] sm:$0xff]
    %v1148 = vld [vmem:[%s5 + $0x38] sm:$0xff]
    %v1149 = vld [vmem:[%s5 + $0x40] sm:$0xff]
    %v1150 = vld [vmem:[%s5 + $0x48] sm:$0xff]
    %v1151 = vld [vmem:[%s5 + $0x50] sm:$0xff]
    %v1152 = vld [vmem:[%s5 + $0x58] sm:$0xff]
    %v1153 = vld [vmem:[%s5 + $0x60] sm:$0xff]
    %v1154 = vld [vmem:[%s5 + $0x68] sm:$0xff]
    %v1155 = vld [vmem:[%s5 + $0x70] sm:$0xff]
    %v1156 = vld [vmem:[%s5 + $0x78] sm:$0xff]
    %v1157 = vld [vmem:[%s6] sm:$0x1]
    %v1159 = vlaneseq
    %v1160 = vshrl.u32 %v1159, 7
    %v1161 = vsub.s32 0, %v1160
    %v1162 = vrot.slane %v1157, %v1161
    %1164 = vmatprep.subr.mxu0 0.0
    %1165 = vmatpush1.msra.mxu0 %v1141
    %1166 = vmatprep.subr.mxu0 0.0
    %1167 = vmatpush1.msra.mxu0 %v1142
    %1168 = vmatprep.subr.mxu0 0.0
    %1169 = vmatpush1.msra.mxu0 %v1143
    %1170 = vmatprep.subr.mxu0 0.0
    %1171 = vmatpush1.msra.mxu0 %v1144
    %1172 = vmatprep.subr.mxu0 0.0
    %1173 = vmatpush1.msra.mxu0 %v1145
    %1174 = vmatprep.subr.mxu0 0.0
    %1175 = vmatpush1.msra.mxu0 %v1146
    %1176 = vmatprep.subr.mxu0 0.0
    %1177 = vmatpush1.msra.mxu0 %v1147
    %1178 = vmatprep.subr.mxu0 0.0
    %1179 = vmatpush1.msra.mxu0 %v1148
    %1180 = vmatprep.subr.mxu0 0.0
    %1181 = vmatpush1.msra.mxu0 %v1149
    %1182 = vmatprep.subr.mxu0 0.0
    %1183 = vmatpush1.msra.mxu0 %v1150
    %1184 = vmatprep.subr.mxu0 0.0
    %1185 = vmatpush1.msra.mxu0 %v1151
    %1186 = vmatprep.subr.mxu0 0.0
    %1187 = vmatpush1.msra.mxu0 %v1152
    %1188 = vmatprep.subr.mxu0 0.0
    %1189 = vmatpush1.msra.mxu0 %v1153
    %1190 = vmatprep.subr.mxu0 0.0
    %1191 = vmatpush1.msra.mxu0 %v1154
    %1192 = vmatprep.subr.mxu0 0.0
    %1193 = vmatpush1.msra.mxu0 %v1155
    %1194 = vmatprep.subr.mxu0 0.0
    %1195 = vmatpush1.msra.mxu0 %v1156
    %1196 = vmatprep.subr.mxu0 0.0
    %1197 = vmatpush1.msra.mxu0 0.0
    %1198 = vmatprep.subr.mxu0 0.0
    %1199 = vmatpush1.msra.mxu0 0.0
    %1200 = vmatprep.subr.mxu0 0.0
    %1201 = vmatpush1.msra.mxu0 0.0
    %1202 = vmatprep.subr.mxu0 0.0
    %1203 = vmatpush1.msra.mxu0 0.0
    %1204 = vmatprep.subr.mxu0 0.0
    %1205 = vmatpush1.msra.mxu0 0.0
    %1206 = vmatprep.subr.mxu0 0.0
    %1207 = vmatpush1.msra.mxu0 0.0
    %1208 = vmatprep.subr.mxu0 0.0
    %1209 = vmatpush1.msra.mxu0 0.0
    %1210 = vmatprep.subr.mxu0 0.0
    %1211 = vmatpush1.msra.mxu0 0.0
    %1212 = vmatprep.subr.mxu0 0.0
    %1213 = vmatpush1.msra.mxu0 0.0
    %1214 = vmatprep.subr.mxu0 0.0
    %1215 = vmatpush1.msra.mxu0 0.0
    %1216 = vmatprep.subr.mxu0 0.0
    %1217 = vmatpush1.msra.mxu0 0.0
    %1218 = vmatprep.subr.mxu0 0.0
    %1219 = vmatpush1.msra.mxu0 0.0
    %1220 = vmatprep.subr.mxu0 0.0
    %1221 = vmatpush1.msra.mxu0 0.0
    %1222 = vmatprep.subr.mxu0 0.0
    %1223 = vmatpush1.msra.mxu0 0.0
    %1224 = vmatprep.subr.mxu0 0.0
    %1225 = vmatpush1.msra.mxu0 0.0
    %1226 = vmatprep.subr.mxu0 0.0
    %1227 = vmatpush1.msra.mxu0 0.0
    %1228 = vmatprep.mubr.f32.mxu0 0.0
    %1229 = vmatmul.mubr.f32.gmra.mrb[0].mxu0 %v1140
    %v1230 = vpop.f32.mrb[0].mxu0
    %v1231 = vadd.f32 %v1162, %v1230
    %v1232 = vpop.f32.mrb[0].mxu0
    %1233 = vdwg.mxu0
    %v1234 = vmax.f32 %v1231, 0.0
    %v1235 = vld [vmem:[%s7] sm:$0xff]
    %v1236 = vld [vmem:[%s7 + $0x8] sm:$0xff]
    %v1237 = vld [vmem:[%s7 + $0x10] sm:$0xff]
    %v1238 = vld [vmem:[%s7 + $0x18] sm:$0xff]
    %v1239 = vld [vmem:[%s7 + $0x20] sm:$0xff]
    %v1240 = vld [vmem:[%s7 + $0x28] sm:$0xff]
    %v1241 = vld [vmem:[%s7 + $0x30] sm:$0xff]
    %v1242 = vld [vmem:[%s7 + $0x38] sm:$0xff]
    %v1243 = vld [vmem:[%s7 + $0x40] sm:$0xff]
    %v1244 = vld [vmem:[%s7 + $0x48] sm:$0xff]
    %v1245 = vld [vmem:[%s7 + $0x50] sm:$0xff]
    %v1246 = vld [vmem:[%s7 + $0x58] sm:$0xff]
    %v1247 = vld [vmem:[%s7 + $0x60] sm:$0xff]
    %v1248 = vld [vmem:[%s8] sm:$0x1]
    %v1250 = vlaneseq
    %v1251 = vshrl.u32 %v1250, 7
    %v1252 = vsub.s32 0, %v1251
    %v1253 = vrot.slane %v1248, %v1252
    %vm1255 = vcmask 850944
    %v1257 = vsel %vm1255, %v1234, 0
    %1259 = vmatprep.subr.mxu0 0.0
    %1260 = vmatpush1.msra.mxu0 %v1235
    %1261 = vmatprep.subr.mxu0 0.0
    %1262 = vmatpush1.msra.mxu0 %v1236
    %1263 = vmatprep.subr.mxu0 0.0
    %1264 = vmatpush1.msra.mxu0 %v1237
    %1265 = vmatprep.subr.mxu0 0.0
    %1266 = vmatpush1.msra.mxu0 %v1238
    %1267 = vmatprep.subr.mxu0 0.0
    %1268 = vmatpush1.msra.mxu0 %v1239
    %1269 = vmatprep.subr.mxu0 0.0
    %1270 = vmatpush1.msra.mxu0 %v1240
    %1271 = vmatprep.subr.mxu0 0.0
    %1272 = vmatpush1.msra.mxu0 %v1241
    %1273 = vmatprep.subr.mxu0 0.0
    %1274 = vmatpush1.msra.mxu0 %v1242
    %1275 = vmatprep.subr.mxu0 0.0
    %1276 = vmatpush1.msra.mxu0 %v1243
    %1277 = vmatprep.subr.mxu0 0.0
    %1278 = vmatpush1.msra.mxu0 %v1244
    %1279 = vmatprep.subr.mxu0 0.0
    %1280 = vmatpush1.msra.mxu0 %v1245
    %1281 = vmatprep.subr.mxu0 0.0
    %1282 = vmatpush1.msra.mxu0 %v1246
    %1283 = vmatprep.subr.mxu0 0.0
    %1284 = vmatpush1.msra.mxu0 %v1247
    %1285 = vmatprep.subr.mxu0 0.0
    %1286 = vmatpush1.msra.mxu0 0.0
    %1287 = vmatprep.subr.mxu0 0.0
    %1288 = vmatpush1.msra.mxu0 0.0
    %1289 = vmatprep.subr.mxu0 0.0
    %1290 = vmatpush1.msra.mxu0 0.0
    %1291 = vmatprep.subr.mxu0 0.0
    %1292 = vmatpush1.msra.mxu0 0.0
    %1293 = vmatprep.subr.mxu0 0.0
    %1294 = vmatpush1.msra.mxu0 0.0
    %1295 = vmatprep.subr.mxu0 0.0
    %1296 = vmatpush1.msra.mxu0 0.0
    %1297 = vmatprep.subr.mxu0 0.0
    %1298 = vmatpush1.msra.mxu0 0.0
    %1299 = vmatprep.subr.mxu0 0.0
    %1300 = vmatpush1.msra.mxu0 0.0
    %1301 = vmatprep.subr.mxu0 0.0
    %1302 = vmatpush1.msra.mxu0 0.0
    %1303 = vmatprep.subr.mxu0 0.0
    %1304 = vmatpush1.msra.mxu0 0.0
    %1305 = vmatprep.subr.mxu0 0.0
    %1306 = vmatpush1.msra.mxu0 0.0
    %1307 = vmatprep.subr.mxu0 0.0
    %1308 = vmatpush1.msra.mxu0 0.0
    %1309 = vmatprep.subr.mxu0 0.0
    %1310 = vmatpush1.msra.mxu0 0.0
    %1311 = vmatprep.subr.mxu0 0.0
    %1312 = vmatpush1.msra.mxu0 0.0
    %1313 = vmatprep.subr.mxu0 0.0
    %1314 = vmatpush1.msra.mxu0 0.0
    %1315 = vmatprep.subr.mxu0 0.0
    %1316 = vmatpush1.msra.mxu0 0.0
    %1317 = vmatprep.subr.mxu0 0.0
    %1318 = vmatpush1.msra.mxu0 0.0
    %1319 = vmatprep.subr.mxu0 0.0
    %1320 = vmatpush1.msra.mxu0 0.0
    %1321 = vmatprep.subr.mxu0 0.0
    %1322 = vmatpush1.msra.mxu0 0.0
    %1323 = vmatprep.mubr.f32.mxu0 0.0
    %1324 = vmatmul.mubr.f32.gmra.mrb[0].mxu0 %v1257
    %v1325 = vpop.f32.mrb[0].mxu0
    %v1326 = vadd.f32 %v1253, %v1325
    %v1327 = vpop.f32.mrb[0].mxu0
    %1328 = vdwg.mxu0
    %v1329 = vmax.f32 %v1326, 0.0
    %v1330 = vld [vmem:[%s9] sm:$0xff]
    %v1331 = vld [vmem:[%s9 + $0x8] sm:$0xff]
    %v1332 = vld [vmem:[%s9 + $0x10] sm:$0xff]
    %v1333 = vld [vmem:[%s9 + $0x18] sm:$0xff]
    %v1334 = vld [vmem:[#allocation6] sm:$0x1]
    %v1336 = vlaneseq
    %v1337 = vshrl.u32 %v1336, 7
    %v1338 = vsub.s32 0, %v1337
    %v1339 = vrot.slane %v1334, %v1338
    %vm1341 = vcmask 261120
    %v1343 = vsel %vm1341, %v1329, 0
    %1345 = vmatprep.subr.mxu0 0.0
    %1346 = vmatpush1.msra.mxu0 %v1330
    %1347 = vmatprep.subr.mxu0 0.0
    %1348 = vmatpush1.msra.mxu0 %v1331
    %1349 = vmatprep.subr.mxu0 0.0
    %1350 = vmatpush1.msra.mxu0 %v1332
    %1351 = vmatprep.subr.mxu0 0.0
    %1352 = vmatpush1.msra.mxu0 %v1333
    %1353 = vmatprep.subr.mxu0 0.0
    %1354 = vmatpush1.msra.mxu0 0.0
    %1355 = vmatprep.subr.mxu0 0.0
    %1356 = vmatpush1.msra.mxu0 0.0
    %1357 = vmatprep.subr.mxu0 0.0
    %1358 = vmatpush1.msra.mxu0 0.0
    %1359 = vmatprep.subr.mxu0 0.0
    %1360 = vmatpush1.msra.mxu0 0.0
    %1361 = vmatprep.subr.mxu0 0.0
    %1362 = vmatpush1.msra.mxu0 0.0
    %1363 = vmatprep.subr.mxu0 0.0
    %1364 = vmatpush1.msra.mxu0 0.0
    %1365 = vmatprep.subr.mxu0 0.0
    %1366 = vmatpush1.msra.mxu0 0.0
    %1367 = vmatprep.subr.mxu0 0.0
    %1368 = vmatpush1.msra.mxu0 0.0
    %1369 = vmatprep.subr.mxu0 0.0
    %1370 = vmatpush1.msra.mxu0 0.0
    %1371 = vmatprep.subr.mxu0 0.0
    %1372 = vmatpush1.msra.mxu0 0.0
    %1373 = vmatprep.subr.mxu0 0.0
    %1374 = vmatpush1.msra.mxu0 0.0
    %1375 = vmatprep.subr.mxu0 0.0
    %1376 = vmatpush1.msra.mxu0 0.0
    %1377 = vmatprep.subr.mxu0 0.0
    %1378 = vmatpush1.msra.mxu0 0.0
    %1379 = vmatprep.subr.mxu0 0.0
    %1380 = vmatpush1.msra.mxu0 0.0
    %1381 = vmatprep.subr.mxu0 0.0
    %1382 = vmatpush1.msra.mxu0 0.0
    %1383 = vmatprep.subr.mxu0 0.0
    %1384 = vmatpush1.msra.mxu0 0.0
    %1385 = vmatprep.subr.mxu0 0.0
    %1386 = vmatpush1.msra.mxu0 0.0
    %1387 = vmatprep.subr.mxu0 0.0
    %1388 = vmatpush1.msra.mxu0 0.0
    %1389 = vmatprep.subr.mxu0 0.0
    %1390 = vmatpush1.msra.mxu0 0.0
    %1391 = vmatprep.subr.mxu0 0.0
    %1392 = vmatpush1.msra.mxu0 0.0
    %1393 = vmatprep.subr.mxu0 0.0
    %1394 = vmatpush1.msra.mxu0 0.0
    %1395 = vmatprep.subr.mxu0 0.0
    %1396 = vmatpush1.msra.mxu0 0.0
    %1397 = vmatprep.subr.mxu0 0.0
    %1398 = vmatpush1.msra.mxu0 0.0
    %1399 = vmatprep.subr.mxu0 0.0
    %1400 = vmatpush1.msra.mxu0 0.0
    %1401 = vmatprep.subr.mxu0 0.0
    %1402 = vmatpush1.msra.mxu0 0.0
    %1403 = vmatprep.subr.mxu0 0.0
    %1404 = vmatpush1.msra.mxu0 0.0
    %1405 = vmatprep.subr.mxu0 0.0
    %1406 = vmatpush1.msra.mxu0 0.0
    %1407 = vmatprep.subr.mxu0 0.0
    %1408 = vmatpush1.msra.mxu0 0.0
    %1409 = vmatprep.mubr.f32.mxu0 0.0
    %1410 = vmatmul.mubr.f32.gmra.mrb[0].mxu0 %v1343
    %v1411 = vpop.f32.mrb[0].mxu0
    %v1412 = vadd.f32 %v1339, %v1411
    %v1413 = vpop.f32.mrb[0].mxu0
    %1414 = vdwg.mxu0
    %vm1415 = vcmask 15360
    %v1416 = vsel %vm1415, %v1412, -inf
    %1417 = vmax.xlane.f32.xlu0 %v1416
    %v1418 = vpop.xlane.xlu0 %1417
    %v1419 = vsub.f32 %v1412, %v1418
    %v1420 = vmul.f32 %v1419, 1.442695
    %v1421 = vpow.pop %v1420
    %v1422 = vsel %vm1415, %v1421, 0.0
    %1423 = vadd.xlane.f32.xlu0 %v1422
    %v1424 = vpop.xlane.xlu0 %1423
    %v1425 = vlog2.pop %v1424
    %v1426 = vmul.f32 %v1425, 0.6931472
    %v1427 = vsub.f32 %v1419, %v1426
    %v1428 = vld [vmem:[%s11] sm:$0xff]
    %1430 = vset.pattern.permute.xlu0 0
    %1431 = vperm.xlu0 %1430, %v1428
    %v1432 = vpop.permute.xlu0 %1431
    %v1434 = vmul.f32 %v1427, %v1432
    %1435 = vst.msk [vmem:[%s12] sm:$0xff] %vm1415, %v1434
    // Predicated region
    $region62: #{cnn_mlp_forward.1} parent=1 // pred_check
      _
    $region63: #{cnn_mlp_forward.1} parent=1 // pred_check_branch
      %1437 = sbr.rel (0) target = $region65
    $region64: #{cnn_mlp_forward.1} parent=1 // pred_region
      _
    $region65: #{cnn_mlp_forward.1} parent=1 // pred_fallthru
      _
    // Predicated region
    $region66: #{cnn_mlp_forward.1} parent=1 // pred_check
      _
    $region67: #{cnn_mlp_forward.1} parent=1 // pred_check_branch
      %1439 = sbr.rel (0) target = $region69
    $region68: #{cnn_mlp_forward.1} parent=1 // pred_region
      _
    $region69: #{cnn_mlp_forward.1} parent=1 // pred_fallthru
      _
    %1440 = vsyncpa [#allocation3], 1
    %1441 = vsyncpa [#allocation5], 1

</llo_original>
